<compile_context>
chip_gen: v6e
topology: v6e:2x2x1
jax: 0.10.0
libtpu: 0.0.40
codegen_flags: <defaults>
</compile_context>

<pallas_src>
import functools

import jax
import jax.numpy as jnp
from jax.experimental import pallas as pl
from jax.experimental.pallas import tpu as pltpu

# Below this batch size the pallas_call fixed dispatch + prologue weight DMAs dominate the
# nanoseconds of real work and a single fused XLA kernel wins.
# TODO(synk): measure the real crossover with xprof (likely 512-2048 after the tiling fix).
_MIN_PALLAS_BATCH = 256

# v6e/v7x: casting x / w1 to bf16 halves the dominant HBM read and runs the first matmul on
# the bf16-native MXU.  Disabled by default so the 1e-3 f32 parity check below stays tight;
# enable for large-batch v6e/v7x deployments (elementwise math stays in f32 either way,
# which also keeps the v5e VPU/EUP path clean).
_USE_BF16_MXU_INPUTS = False


def _mlp_kernel(x_ref, w1_ref, b1_ref, w2_ref, b2_ref, w3_ref, b3_ref, o_ref,
                *, apply_sigmoid: bool):
    """Linear -> LeakyReLU(0.2) -> Linear -> LeakyReLU(0.2) -> Linear(->1) [-> Sigmoid].

    x_ref  : (TB, D)  raw input rows (label-column drop folded into zeroed rows of w1)
    w3_ref : (8, H2)  final-layer weight; row 0 is the real (1, H2) row, rows 1..7 zero
    b3_ref : (1, 1)   final-layer bias, SMEM scalar
    o_ref  : (8, TB)  sublane-padded, lane-dense output slab (row 0 is the real output)
    """
    x = x_ref[...]

    # Dropout(0.5) layers are identity in eval mode.
    h = jnp.dot(x, w1_ref[...], preferred_element_type=jnp.float32) + b1_ref[...]
    h = jnp.where(h > 0, h, 0.2 * h)      # LeakyReLU(0.2), f32 VPU math

    h = jnp.dot(h, w2_ref[...], preferred_element_type=jnp.float32) + b2_ref[...]
    h = jnp.where(h > 0, h, 0.2 * h)

    # Final H2 -> 1 layer as an NT matmul: (8, H2) x (TB, H2)^T -> (8, TB).  Batch lands
    # lane-dense; keeping all 8 sublanes makes the store a full unmasked vst (rows 1..7 are
    # zero-weight padding, sliced off in the wrapper).  Avoids a 1-column MXU pass and any
    # (TB, 1) -> (1, TB) relayout.
    logits = jax.lax.dot_general(
        w3_ref[...], h,
        dimension_numbers=(((1,), (1,)), ((), ())),
        preferred_element_type=jnp.float32)
    logits = logits + b3_ref[0, 0]        # SMEM scalar broadcast add
    if apply_sigmoid:
        logits = jax.nn.sigmoid(logits)
    o_ref[...] = logits.astype(o_ref.dtype)


def _round_up(n, m):
    return ((n + m - 1) // m) * m


def _pick_batch_tile(batch):
    # Largest tile wins: per-grid-step overhead (~0.35 us) dwarfs the per-step work at these
    # shapes, so prefer a single grid step (G=1) for B <= 2048.  TB must be a multiple of
    # 128 (output lanes) and 8 (input sublanes).  TB=2048 keeps the double-buffered x tile
    # plus f32 intermediates at a couple of MiB, far under VMEM on every generation
    # (including v7x's 64 MiB / 32 MiB default scoped limit).
    return min(_round_up(batch, 128), 2048)


def mlp_pallas(x, kparams, *, apply_sigmoid):
    """Runs the classifier MLP on raw (B, INPUT_DIM) rows, returns (B,) float32."""
    w1f, b1, w2, b2, w3p, b3 = kparams
    B, D = x.shape
    H1 = w1f.shape[1]
    H2 = w2.shape[1]

    if _USE_BF16_MXU_INPUTS:
        x = x.astype(jnp.bfloat16)
        w1f = w1f.astype(jnp.bfloat16)

    TB = _pick_batch_tile(B)
    # G == 1 for B <= 2048.  Ragged tail rows (lanes >= B) are computed on padded data and
    # sliced off below; nothing in the kernel reduces across rows, so they stay inert.
    G = pl.cdiv(B, TB)

    kernel = functools.partial(_mlp_kernel, apply_sigmoid=apply_sigmoid)

    out = pl.pallas_call(
        kernel,
        out_shape=jax.ShapeDtypeStruct((8, G * TB), jnp.float32),
        grid_spec=pltpu.PrefetchScalarGridSpec(
            num_scalar_prefetch=0,
            grid=(G,),
            in_specs=[
                pl.BlockSpec((TB, D), lambda i: (i, 0)),    # activations tiled over batch
                pl.BlockSpec((D, H1), lambda i: (0, 0)),    # weights resident across grid
                pl.BlockSpec((1, H1), lambda i: (0, 0)),
                pl.BlockSpec((H1, H2), lambda i: (0, 0)),
                pl.BlockSpec((1, H2), lambda i: (0, 0)),
                pl.BlockSpec((8, H2), lambda i: (0, 0)),    # final weight (sublane-padded)
                pl.BlockSpec(memory_space=pltpu.MemorySpace.SMEM),  # final bias scalar
            ],
            # 8-sublane, lane-dense output block: full unmasked vst per step.
            out_specs=pl.BlockSpec((8, TB), lambda i: (0, i)),
        ),
        compiler_params=pltpu.CompilerParams(
            # Multi-step grids only occur when each step carries 2048 rows, which is ample
            # per-TensorCore work for v7x megacore sharding; for B<=2048 there is one step.
            dimension_semantics=("parallel",),
        ),
    )(x, w1f, b1, w2, b2, w3p, b3)

    # Row 0 holds the real outputs; lanes >= B are ragged-tail padding (keep this slice).
    return out[0, :B]


def _prep_kernel_params(params, st, ed, input_dim):
    """Fold the label-column drop into w1 and reshape w3 for the lane-dense head."""
    w1, b1, w2, b2, w3, b3 = params
    H1 = w1.shape[1]
    H2 = w3.shape[0]
    # new_input = concat(x[:, :st], x[:, ed:])  ==  x @ w1_full  with rows st:ed zeroed.
    w1_full = jnp.zeros((input_dim, H1), w1.dtype)
    w1_full = w1_full.at[:st].set(w1[:st])
    w1_full = w1_full.at[ed:].set(w1[st:])
    # Final weight as a sublane-padded row block (row 0 real, rows 1..7 zero).
    w3_pad = jnp.zeros((8, H2), w3.dtype).at[0:1].set(w3.T)
    return w1_full, b1, w2, b2, w3_pad, b3      # b3 stays (1, 1), goes to SMEM


def _mlp_reference(x_new, params, *, apply_sigmoid):
    """Pure-XLA path: tiny batches / multi-class head / correctness reference."""
    w1, b1, w2, b2, w3, b3 = params
    h = x_new @ w1 + b1
    h = jnp.where(h > 0, h, 0.2 * h)
    h = h @ w2 + b2
    h = jnp.where(h > 0, h, 0.2 * h)
    h = h @ w3 + b3
    return jax.nn.sigmoid(h) if apply_sigmoid else h


def classifier_forward(x, params, st_ed):
    """Mirrors Classifier.forward with first_layer=None."""
    st, ed = st_ed
    diff = ed - st
    B = x.shape[0]

    if diff == 1:
        label = x[:, st:ed]
    else:
        label = jnp.argmax(x[:, st:ed], axis=-1)

    out_dim = params[-2].shape[1]
    apply_sigmoid = (diff == 2)
    use_pallas = (diff <= 2) and (out_dim == 1) and (B >= _MIN_PALLAS_BATCH)

    if use_pallas:
        kparams = _prep_kernel_params(params, st, ed, x.shape[1])
        out = mlp_pallas(x, kparams, apply_sigmoid=apply_sigmoid)   # already flat == .view(-1)
    else:
        # TODO(synk): diff > 2 (multi-class head) and tiny batches use plain XLA; a Pallas
        # kernel is not worth its fixed overhead at those sizes.
        new_input = jnp.concatenate([x[:, :st], x[:, ed:]], axis=1)
        out = _mlp_reference(new_input, params, apply_sigmoid=apply_sigmoid)
        if diff <= 2:
            out = out.reshape(-1)

    sparsity_weights = None          # first_layer is None
    return out, label, sparsity_weights


def init_params(key, in_dim, classifier_dim, out_dim):
    """Deterministic Linear params ((in, out) layout, Kaiming-uniform-like bounds)."""
    dims = [in_dim] + list(classifier_dim) + [out_dim]
    params = []
    for i in range(len(dims) - 1):
        key, kw, kb = jax.random.split(key, 3)
        fan_in, fan_out = dims[i], dims[i + 1]
        bound = 1.0 / jnp.sqrt(fan_in)
        w = jax.random.uniform(kw, (fan_in, fan_out), jnp.float32, -bound, bound)
        b = jax.random.uniform(kb, (1, fan_out), jnp.float32, -bound, bound)
        params += [w, b]
    return tuple(params)


if __name__ == "__main__":
    key = jax.random.PRNGKey(0)

    B = 500                            # CTGAN default batch; exercises ragged tail (TB=512, G=1)
    INPUT_DIM = 34
    ST_ED = (4, 6)                     # ed - st == 2 => binary head: Linear(dim,1) + Sigmoid
    CLASSIFIER_DIM = (64, 32)
    NEW_DIM = INPUT_DIM - (ST_ED[1] - ST_ED[0])   # 32
    OUT_DIM = 1

    k_x, k_p = jax.random.split(key)
    x = jax.random.normal(k_x, (B, INPUT_DIM), dtype=jnp.float32)
    params = init_params(k_p, NEW_DIM, CLASSIFIER_DIM, OUT_DIM)

    fwd = jax.jit(classifier_forward, static_argnames="st_ed")
    out, label, sparsity_weights = fwd(x, params, st_ed=ST_ED)
    jax.block_until_ready(out)
    jax.block_until_ready(label)

    # Correctness check against the un-fused pure-XLA reference (explicit concat + dense MLP).
    st, ed = ST_ED
    x_new = jnp.concatenate([x[:, :st], x[:, ed:]], axis=1)
    ref = _mlp_reference(x_new, params, apply_sigmoid=True).reshape(-1)

    assert out.shape == (B,)
    assert label.shape == (B,)
    assert sparsity_weights is None
    assert jnp.allclose(out, ref, atol=1e-3, rtol=1e-3)
    assert jnp.array_equal(label, jnp.argmax(x[:, st:ed], axis=-1))
    print("KERNEL_OK")
</pallas_src>

<mosaic_0001>
module attributes {stable_mosaic.version = 11 : i64} {
  func.func @_mlp_kernel(%arg0: i32, %arg1: memref<512x34xf32, #tpu.memory_space<vmem>>, %arg2: memref<34x64xf32, #tpu.memory_space<vmem>>, %arg3: memref<1x64xf32, #tpu.memory_space<vmem>>, %arg4: memref<64x32xf32, #tpu.memory_space<vmem>>, %arg5: memref<1x32xf32, #tpu.memory_space<vmem>>, %arg6: memref<8x32xf32, #tpu.memory_space<vmem>>, %arg7: memref<1x1xf32, #tpu.memory_space<smem>>, %arg8: memref<8x512xf32, #tpu.memory_space<vmem>>) attributes {dimension_semantics = [#tpu.dimension_semantics<parallel>], iteration_bounds = array<i64: 1>, scalar_prefetch = 0 : i64, scratch_operands = 0 : i64, tpu.core_type = #tpu.core_type<tc>, window_params = [{transform_indices = @transform_0, window_bounds = array<i64: 512, 34>}, {pipeline_mode = #tpu.pipeline_mode<synchronous>, transform_indices = @transform_1, window_bounds = array<i64: 34, 64>}, {pipeline_mode = #tpu.pipeline_mode<synchronous>, transform_indices = @transform_2, window_bounds = array<i64: 1, 64>}, {pipeline_mode = #tpu.pipeline_mode<synchronous>, transform_indices = @transform_3, window_bounds = array<i64: 64, 32>}, {pipeline_mode = #tpu.pipeline_mode<synchronous>, transform_indices = @transform_4, window_bounds = array<i64: 1, 32>}, {pipeline_mode = #tpu.pipeline_mode<synchronous>, transform_indices = @transform_5, window_bounds = array<i64: 8, 32>}, {transform_indices = @transform_6, window_bounds = array<i64: 1, 1>}, {transform_indices = @transform_7, window_bounds = array<i64: 8, 512>}]} {
    %c0 = arith.constant 0 : index
    %c0_0 = arith.constant 0 : index
    %0 = vector.load %arg1[%c0, %c0_0] : memref<512x34xf32, #tpu.memory_space<vmem>>, vector<512x34xf32>
    %c0_1 = arith.constant 0 : index
    %c0_2 = arith.constant 0 : index
    %1 = vector.load %arg2[%c0_1, %c0_2] : memref<34x64xf32, #tpu.memory_space<vmem>>, vector<34x64xf32>
    %cst = arith.constant dense<0.000000e+00> : vector<512x64xf32>
    %2 = tpu.matmul %0, %1, %cst {dimension_numbers = #tpu.dot_dimension_numbers<[1], [0], [0], [1], [0, 0, 1, 1], [], []>} : vector<512x34xf32>, vector<34x64xf32>, vector<512x64xf32> -> vector<512x64xf32>
    %c0_3 = arith.constant 0 : index
    %c0_4 = arith.constant 0 : index
    %3 = vector.load %arg3[%c0_3, %c0_4] : memref<1x64xf32, #tpu.memory_space<vmem>>, vector<1x64xf32>
    %4 = vector.broadcast %3 : vector<1x64xf32> to vector<512x64xf32>
    %5 = arith.addf %2, %4 : vector<512x64xf32>
    %cst_5 = arith.constant 0.000000e+00 : f32
    %6 = vector.broadcast %cst_5 : f32 to vector<512x64xf32>
    %7 = arith.cmpf ogt, %5, %6 : vector<512x64xf32>
    %cst_6 = arith.constant 2.000000e-01 : f32
    %8 = vector.broadcast %cst_6 : f32 to vector<512x64xf32>
    %9 = arith.mulf %8, %5 : vector<512x64xf32>
    %10 = arith.select %7, %5, %9 : vector<512x64xi1>, vector<512x64xf32>
    %c0_7 = arith.constant 0 : index
    %c0_8 = arith.constant 0 : index
    %11 = vector.load %arg4[%c0_7, %c0_8] : memref<64x32xf32, #tpu.memory_space<vmem>>, vector<64x32xf32>
    %cst_9 = arith.constant dense<0.000000e+00> : vector<512x32xf32>
    %12 = tpu.matmul %10, %11, %cst_9 {dimension_numbers = #tpu.dot_dimension_numbers<[1], [0], [0], [1], [0, 0, 1, 1], [], []>} : vector<512x64xf32>, vector<64x32xf32>, vector<512x32xf32> -> vector<512x32xf32>
    %c0_10 = arith.constant 0 : index
    %c0_11 = arith.constant 0 : index
    %13 = vector.load %arg5[%c0_10, %c0_11] : memref<1x32xf32, #tpu.memory_space<vmem>>, vector<1x32xf32>
    %14 = vector.broadcast %13 : vector<1x32xf32> to vector<512x32xf32>
    %15 = arith.addf %12, %14 : vector<512x32xf32>
    %cst_12 = arith.constant 0.000000e+00 : f32
    %16 = vector.broadcast %cst_12 : f32 to vector<512x32xf32>
    %17 = arith.cmpf ogt, %15, %16 : vector<512x32xf32>
    %cst_13 = arith.constant 2.000000e-01 : f32
    %18 = vector.broadcast %cst_13 : f32 to vector<512x32xf32>
    %19 = arith.mulf %18, %15 : vector<512x32xf32>
    %20 = arith.select %17, %15, %19 : vector<512x32xi1>, vector<512x32xf32>
    %c0_14 = arith.constant 0 : index
    %c0_15 = arith.constant 0 : index
    %21 = vector.load %arg6[%c0_14, %c0_15] : memref<8x32xf32, #tpu.memory_space<vmem>>, vector<8x32xf32>
    %cst_16 = arith.constant dense<0.000000e+00> : vector<8x512xf32>
    %22 = tpu.matmul %21, %20, %cst_16 {dimension_numbers = #tpu.dot_dimension_numbers<[1], [1], [0], [0], [0, 0, 1, 0], [], []>} : vector<8x32xf32>, vector<512x32xf32>, vector<8x512xf32> -> vector<8x512xf32>
    %c0_17 = arith.constant 0 : index
    %c0_18 = arith.constant 0 : index
    %23 = memref.load %arg7[%c0_17, %c0_18] : memref<1x1xf32, #tpu.memory_space<smem>>
    %24 = vector.broadcast %23 : f32 to vector<8x512xf32>
    %25 = arith.addf %22, %24 : vector<8x512xf32>
    %26 = arith.negf %25 : vector<8x512xf32>
    %27 = math.exp %26 : vector<8x512xf32>
    %cst_19 = arith.constant 1.000000e+00 : f32
    %28 = vector.broadcast %cst_19 : f32 to vector<8x512xf32>
    %29 = arith.addf %28, %27 : vector<8x512xf32>
    %30 = arith.divf %28, %29 : vector<8x512xf32>
    %c0_20 = arith.constant 0 : index
    %c0_21 = arith.constant 0 : index
    %31 = vector.load %arg8[%c0_20, %c0_21] : memref<8x512xf32, #tpu.memory_space<vmem>>, vector<8x512xf32>
    tpu.vector_store %arg8[%c0_20, %c0_21], %30 {strides = array<i32>} : memref<8x512xf32, #tpu.memory_space<vmem>>, vector<8x512xf32>,
    return
  }
  func.func @transform_0(%arg0: i32) -> (i32, i32) {
    %c0_i32 = arith.constant 0 : i32
    %c0_i32_0 = arith.constant 0 : i32
    return %arg0, %c0_i32 : i32, i32
  }
  func.func @transform_1(%arg0: i32) -> (i32, i32) {
    %c0_i32 = arith.constant 0 : i32
    %c0_i32_0 = arith.constant 0 : i32
    %c0_i32_1 = arith.constant 0 : i32
    return %c0_i32, %c0_i32_0 : i32, i32
  }
  func.func @transform_2(%arg0: i32) -> (i32, i32) {
    %c0_i32 = arith.constant 0 : i32
    %c0_i32_0 = arith.constant 0 : i32
    %c0_i32_1 = arith.constant 0 : i32
    return %c0_i32, %c0_i32_0 : i32, i32
  }
  func.func @transform_3(%arg0: i32) -> (i32, i32) {
    %c0_i32 = arith.constant 0 : i32
    %c0_i32_0 = arith.constant 0 : i32
    %c0_i32_1 = arith.constant 0 : i32
    return %c0_i32, %c0_i32_0 : i32, i32
  }
  func.func @transform_4(%arg0: i32) -> (i32, i32) {
    %c0_i32 = arith.constant 0 : i32
    %c0_i32_0 = arith.constant 0 : i32
    %c0_i32_1 = arith.constant 0 : i32
    return %c0_i32, %c0_i32_0 : i32, i32
  }
  func.func @transform_5(%arg0: i32) -> (i32, i32) {
    %c0_i32 = arith.constant 0 : i32
    %c0_i32_0 = arith.constant 0 : i32
    %c0_i32_1 = arith.constant 0 : i32
    return %c0_i32, %c0_i32_0 : i32, i32
  }
  func.func @transform_6(%arg0: i32) -> (i32, i32) {
    %c0_i32 = arith.constant 0 : i32
    %c0_i32_0 = arith.constant 0 : i32
    %c0_i32_1 = arith.constant 0 : i32
    return %c0_i32, %c0_i32_0 : i32, i32
  }
  func.func @transform_7(%arg0: i32) -> (i32, i32) {
    %c0_i32 = arith.constant 0 : i32
    %c0_i32_0 = arith.constant 0 : i32
    return %c0_i32, %arg0 : i32, i32
  }
}

</mosaic_0001>

<llo_original>
// kernel: classifier_forward.1
$region0: #{classifier_forward.1}
  #allocation0 [shape = 'u32[]', space=smem, size = 0x4, offset = 0x4, fixed_abs, tag = 'smem constant byte address 0x4 - core index']
  #allocation1 [shape = 'u32[144,128]{1,0:T(1,128)}', space=vmem, size = 0x12000, scoped, tag = 'internal scratch']
  #allocation2 [shape = 'f32[1,1]{1,0:T(1,128)S(6)}', space=smem, size = 0x200, scoped, tag = 'scoped memory for classifier_forward.1']
  %s0 = inlined_call_operand.vmem [shape: f32[500,34], index: 0, kind: input, shape index: {}]
  %s1 = inlined_call_operand.vmem [shape: f32[34,64], index: 1, kind: input, shape index: {}]
  %s2 = inlined_call_operand.vmem [shape: f32[1,64], index: 2, kind: input, shape index: {}]
  %s3 = inlined_call_operand.vmem [shape: f32[64,32], index: 3, kind: input, shape index: {}]
  %s4 = inlined_call_operand.vmem [shape: f32[1,32], index: 4, kind: input, shape index: {}]
  %s5 = inlined_call_operand.vmem [shape: f32[8,32], index: 5, kind: input, shape index: {}]
  %s6 = inlined_call_operand.<no memory space> [shape: f32[1,1], index: 6, kind: input, shape index: {}]
  %s7 = inlined_call_operand.vmem [shape: f32[8,512], index: 7, kind: output, shape index: {}]
  %s8 = sld [smem:[#allocation0]]
  $region38: #{classifier_forward.1} parent=0
    _
  %s10 = ssub.s32 1, %s8
  %s11 = scalar_select 0, %s10, %s8
  %12 = sst [smem:[#allocation2]] %s6
  // Predicated region
  $region2: #{classifier_forward.1} parent=0 // pred_check
    _
  $region3: #{classifier_forward.1} parent=0 // pred_check_branch
    %14 = sbr.rel (0) target = $region5
  $region4: #{classifier_forward.1} parent=0 // pred_region
    _
  $region5: #{classifier_forward.1} parent=0 // pred_fallthru
    _
  // Predicated region
  $region6: #{classifier_forward.1} parent=0 // pred_check
    _
  $region7: #{classifier_forward.1} parent=0 // pred_check_branch
    %16 = sbr.rel (0) target = $region9
  $region8: #{classifier_forward.1} parent=0 // pred_region
    _
  $region9: #{classifier_forward.1} parent=0 // pred_fallthru
    _
  // Predicated region
  $region10: #{classifier_forward.1} parent=0 // pred_check
    _
  $region11: #{classifier_forward.1} parent=0 // pred_check_branch
    %18 = sbr.rel (0) target = $region13
  $region12: #{classifier_forward.1} parent=0 // pred_region
    _
  $region13: #{classifier_forward.1} parent=0 // pred_fallthru
    _
  // Predicated region
  $region14: #{classifier_forward.1} parent=0 // pred_check
    _
  $region15: #{classifier_forward.1} parent=0 // pred_check_branch
    %20 = sbr.rel (0) target = $region17
  $region16: #{classifier_forward.1} parent=0 // pred_region
    _
  $region17: #{classifier_forward.1} parent=0 // pred_fallthru
    _
  // Predicated region
  $region18: #{classifier_forward.1} parent=0 // pred_check
    _
  $region19: #{classifier_forward.1} parent=0 // pred_check_branch
    %22 = sbr.rel (0) target = $region21
  $region20: #{classifier_forward.1} parent=0 // pred_region
    _
  $region21: #{classifier_forward.1} parent=0 // pred_fallthru
    _
  // Predicated region
  $region22: #{classifier_forward.1} parent=0 // pred_check
    _
  $region23: #{classifier_forward.1} parent=0 // pred_check_branch
    %24 = sbr.rel (0) target = $region25
  $region24: #{classifier_forward.1} parent=0 // pred_region
    _
  $region25: #{classifier_forward.1} parent=0 // pred_fallthru
    _
  // Predicated region
  $region26: #{classifier_forward.1} parent=0 // pred_check
    _
  $region27: #{classifier_forward.1} parent=0 // pred_check_branch
    %26 = sbr.rel (0) target = $region29
  $region28: #{classifier_forward.1} parent=0 // pred_region
    _
  $region29: #{classifier_forward.1} parent=0 // pred_fallthru
    _
  %v27 = vld [vmem:[%s0] sm:$0xff]
  %v28 = vld [vmem:[%s0 + $0x8] sm:$0xff]
  %v29 = vld [vmem:[%s0 + $0x10] sm:$0xff]
  %v30 = vld [vmem:[%s0 + $0x18] sm:$0xff]
  %v31 = vld [vmem:[%s0 + $0x20] sm:$0xff]
  %v32 = vld [vmem:[%s0 + $0x28] sm:$0xff]
  %v33 = vld [vmem:[%s0 + $0x30] sm:$0xff]
  %v34 = vld [vmem:[%s0 + $0x38] sm:$0xff]
  %v35 = vld [vmem:[%s0 + $0x40] sm:$0xff]
  %v36 = vld [vmem:[%s0 + $0x48] sm:$0xff]
  %v37 = vld [vmem:[%s0 + $0x50] sm:$0xff]
  %v38 = vld [vmem:[%s0 + $0x58] sm:$0xff]
  %v39 = vld [vmem:[%s0 + $0x60] sm:$0xff]
  %v40 = vld [vmem:[%s0 + $0x68] sm:$0xff]
  %v41 = vld [vmem:[%s0 + $0x70] sm:$0xff]
  %v42 = vld [vmem:[%s0 + $0x78] sm:$0xff]
  %v43 = vld [vmem:[%s0 + $0x80] sm:$0xff]
  %v44 = vld [vmem:[%s0 + $0x88] sm:$0xff]
  %v45 = vld [vmem:[%s0 + $0x90] sm:$0xff]
  %v46 = vld [vmem:[%s0 + $0x98] sm:$0xff]
  %v47 = vld [vmem:[%s0 + $0xa0] sm:$0xff]
  %v48 = vld [vmem:[%s0 + $0xa8] sm:$0xff]
  %v49 = vld [vmem:[%s0 + $0xb0] sm:$0xff]
  %v50 = vld [vmem:[%s0 + $0xb8] sm:$0xff]
  %v51 = vld [vmem:[%s0 + $0xc0] sm:$0xff]
  %v52 = vld [vmem:[%s0 + $0xc8] sm:$0xff]
  %v53 = vld [vmem:[%s0 + $0xd0] sm:$0xff]
  %v54 = vld [vmem:[%s0 + $0xd8] sm:$0xff]
  %v55 = vld [vmem:[%s0 + $0xe0] sm:$0xff]
  %v56 = vld [vmem:[%s0 + $0xe8] sm:$0xff]
  %v57 = vld [vmem:[%s0 + $0xf0] sm:$0xff]
  %v58 = vld [vmem:[%s0 + $0xf8] sm:$0xff]
  %v59 = vld [vmem:[%s0 + $0x100] sm:$0xff]
  %v60 = vld [vmem:[%s0 + $0x108] sm:$0xff]
  %v61 = vld [vmem:[%s0 + $0x110] sm:$0xff]
  %v62 = vld [vmem:[%s0 + $0x118] sm:$0xff]
  %v63 = vld [vmem:[%s0 + $0x120] sm:$0xff]
  %v64 = vld [vmem:[%s0 + $0x128] sm:$0xff]
  %v65 = vld [vmem:[%s0 + $0x130] sm:$0xff]
  %v66 = vld [vmem:[%s0 + $0x138] sm:$0xff]
  %v67 = vld [vmem:[%s0 + $0x140] sm:$0xff]
  %v68 = vld [vmem:[%s0 + $0x148] sm:$0xff]
  %v69 = vld [vmem:[%s0 + $0x150] sm:$0xff]
  %v70 = vld [vmem:[%s0 + $0x158] sm:$0xff]
  %v71 = vld [vmem:[%s0 + $0x160] sm:$0xff]
  %v72 = vld [vmem:[%s0 + $0x168] sm:$0xff]
  %v73 = vld [vmem:[%s0 + $0x170] sm:$0xff]
  %v74 = vld [vmem:[%s0 + $0x178] sm:$0xff]
  %v75 = vld [vmem:[%s0 + $0x180] sm:$0xff]
  %v76 = vld [vmem:[%s0 + $0x188] sm:$0xff]
  %v77 = vld [vmem:[%s0 + $0x190] sm:$0xff]
  %v78 = vld [vmem:[%s0 + $0x198] sm:$0xff]
  %v79 = vld [vmem:[%s0 + $0x1a0] sm:$0xff]
  %v80 = vld [vmem:[%s0 + $0x1a8] sm:$0xff]
  %v81 = vld [vmem:[%s0 + $0x1b0] sm:$0xff]
  %v82 = vld [vmem:[%s0 + $0x1b8] sm:$0xff]
  %v83 = vld [vmem:[%s0 + $0x1c0] sm:$0xff]
  %v84 = vld [vmem:[%s0 + $0x1c8] sm:$0xff]
  %v85 = vld [vmem:[%s0 + $0x1d0] sm:$0xff]
  %v86 = vld [vmem:[%s0 + $0x1d8] sm:$0xff]
  %v87 = vld [vmem:[%s0 + $0x1e0] sm:$0xff]
  %v88 = vld [vmem:[%s0 + $0x1e8] sm:$0xff]
  %v89 = vld [vmem:[%s0 + $0x1f0] sm:$0xff]
  %v90 = vld [vmem:[%s0 + $0x1f8] sm:$0xff]
  %v91 = vld [vmem:[%s1] sm:$0xff]
  %v92 = vld [vmem:[%s1 + $0x8] sm:$0xff]
  %v93 = vld [vmem:[%s1 + $0x10] sm:$0xff]
  %v94 = vld [vmem:[%s1 + $0x18] sm:$0xff]
  %v95 = vld [vmem:[%s1 + $0x20] sm:$0x3]
  %v96 = vld [vmem:[%s2] sm:$0x1]
  %v98 = vlaneseq
  %v99 = vshrl.u32 %v98, 7
  %v100 = vsub.s32 0, %v99
  %v101 = vrot.slane %v96, %v100
  %vm103 = vcmask 277504
  %v105 = vsel %vm103, %v27, 0
  %v108 = vsel %vm103, %v28, 0
  %v111 = vsel %vm103, %v29, 0
  %v114 = vsel %vm103, %v30, 0
  %v117 = vsel %vm103, %v31, 0
  %v120 = vsel %vm103, %v32, 0
  %v123 = vsel %vm103, %v33, 0
  %v126 = vsel %vm103, %v34, 0
  %v129 = vsel %vm103, %v35, 0
  %v132 = vsel %vm103, %v36, 0
  %v135 = vsel %vm103, %v37, 0
  %v138 = vsel %vm103, %v38, 0
  %v141 = vsel %vm103, %v39, 0
  %v144 = vsel %vm103, %v40, 0
  %v147 = vsel %vm103, %v41, 0
  %v150 = vsel %vm103, %v42, 0
  %v153 = vsel %vm103, %v43, 0
  %v156 = vsel %vm103, %v44, 0
  %v159 = vsel %vm103, %v45, 0
  %v162 = vsel %vm103, %v46, 0
  %v165 = vsel %vm103, %v47, 0
  %v168 = vsel %vm103, %v48, 0
  %v171 = vsel %vm103, %v49, 0
  %v174 = vsel %vm103, %v50, 0
  %v177 = vsel %vm103, %v51, 0
  %v180 = vsel %vm103, %v52, 0
  %v183 = vsel %vm103, %v53, 0
  %v186 = vsel %vm103, %v54, 0
  %v189 = vsel %vm103, %v55, 0
  %v192 = vsel %vm103, %v56, 0
  %v195 = vsel %vm103, %v57, 0
  %v198 = vsel %vm103, %v58, 0
  %v201 = vsel %vm103, %v59, 0
  %v204 = vsel %vm103, %v60, 0
  %v207 = vsel %vm103, %v61, 0
  %v210 = vsel %vm103, %v62, 0
  %v213 = vsel %vm103, %v63, 0
  %v216 = vsel %vm103, %v64, 0
  %v219 = vsel %vm103, %v65, 0
  %v222 = vsel %vm103, %v66, 0
  %v225 = vsel %vm103, %v67, 0
  %v228 = vsel %vm103, %v68, 0
  %v231 = vsel %vm103, %v69, 0
  %v234 = vsel %vm103, %v70, 0
  %v237 = vsel %vm103, %v71, 0
  %v240 = vsel %vm103, %v72, 0
  %v243 = vsel %vm103, %v73, 0
  %v246 = vsel %vm103, %v74, 0
  %v249 = vsel %vm103, %v75, 0
  %v252 = vsel %vm103, %v76, 0
  %v255 = vsel %vm103, %v77, 0
  %v258 = vsel %vm103, %v78, 0
  %v261 = vsel %vm103, %v79, 0
  %v264 = vsel %vm103, %v80, 0
  %v267 = vsel %vm103, %v81, 0
  %v270 = vsel %vm103, %v82, 0
  %v273 = vsel %vm103, %v83, 0
  %v276 = vsel %vm103, %v84, 0
  %v279 = vsel %vm103, %v85, 0
  %v282 = vsel %vm103, %v86, 0
  %v285 = vsel %vm103, %v87, 0
  %v288 = vsel %vm103, %v88, 0
  %v291 = vsel %vm103, %v89, 0
  %v294 = vsel %vm103, %v90, 0
  %vm296 = vcmask 1041408
  %v298 = vsel %vm296, %v95, 0
  %300 = vmatprep.subr.mxu0 0.0
  %301 = vmatpush1.msra.mxu0 0.0
  %302 = vmatprep.subr.mxu0 0.0
  %303 = vmatpush1.msra.mxu0 0.0
  %304 = vmatprep.subr.mxu0 0.0
  %305 = vmatpush1.msra.mxu0 0.0
  %306 = vmatprep.subr.mxu0 0.0
  %307 = vmatpush1.msra.mxu0 0.0
  %308 = vmatprep.subr.mxu0 0.0
  %309 = vmatpush1.msra.mxu0 0.0
  %310 = vmatprep.subr.mxu0 0.0
  %311 = vmatpush1.msra.mxu0 0.0
  %312 = vmatprep.subr.mxu0 0.0
  %313 = vmatpush1.msra.mxu0 0.0
  %314 = vmatprep.subr.mxu0 0.0
  %315 = vmatpush1.msra.mxu0 0.0
  %316 = vmatprep.subr.mxu0 0.0
  %317 = vmatpush1.msra.mxu0 0.0
  %318 = vmatprep.subr.mxu0 0.0
  %319 = vmatpush1.msra.mxu0 0.0
  %320 = vmatprep.subr.mxu0 0.0
  %321 = vmatpush1.msra.mxu0 0.0
  %322 = vmatprep.subr.mxu0 0.0
  %323 = vmatpush1.msra.mxu0 %v298
  %324 = vmatprep.subr.mxu0 0.0
  %325 = vmatpush1.msra.mxu0 %v94
  %326 = vmatprep.subr.mxu0 0.0
  %327 = vmatpush1.msra.mxu0 %v93
  %328 = vmatprep.subr.mxu0 0.0
  %329 = vmatpush1.msra.mxu0 %v92
  %330 = vmatprep.subr.mxu0 0.0
  %331 = vmatpush1.msra.mxu0 %v91
  %332 = vmatprep.subr.mxu0 0.0
  %333 = vmatpush2.msra.mxu0 0.0
  %334 = vmatprep.subr.mxu0 0.0
  %335 = vmatpush2.msra.mxu0 0.0
  %336 = vmatprep.subr.mxu0 0.0
  %337 = vmatpush2.msra.mxu0 0.0
  %338 = vmatprep.subr.mxu0 0.0
  %339 = vmatpush2.msra.mxu0 0.0
  %340 = vmatprep.subr.mxu0 0.0
  %341 = vmatpush2.msra.mxu0 0.0
  %342 = vmatprep.subr.mxu0 0.0
  %343 = vmatpush2.msra.mxu0 0.0
  %344 = vmatprep.subr.mxu0 0.0
  %345 = vmatpush2.msra.mxu0 0.0
  %346 = vmatprep.subr.mxu0 0.0
  %347 = vmatpush2.msra.mxu0 0.0
  %348 = vmatprep.subr.mxu0 0.0
  %349 = vmatpush2.msra.mxu0 0.0
  %350 = vmatprep.subr.mxu0 0.0
  %351 = vmatpush2.msra.mxu0 0.0
  %352 = vmatprep.subr.mxu0 0.0
  %353 = vmatpush2.msra.mxu0 0.0
  %354 = vmatprep.subr.mxu0 0.0
  %355 = vmatpush2.msra.mxu0 0.0
  %356 = vmatprep.subr.mxu0 0.0
  %357 = vmatpush2.msra.mxu0 0.0
  %358 = vmatprep.subr.mxu0 0.0
  %359 = vmatpush2.msra.mxu0 0.0
  %360 = vmatprep.subr.mxu0 0.0
  %361 = vmatpush2.msra.mxu0 0.0
  %362 = vmatprep.subr.mxu0 0.0
  %363 = vmatpush2.msra.mxu0 0.0
  %364 = vmatprep.mubr.f32.mxu0 0.0
  %365 = vmatmul.mubr.f32.gmra.mxu0 %v105
  %v366 = vpop.f32.mrf.mxu0
  %v367 = vadd.f32 %v101, %v366
  %v368 = vpop.f32.mrf.mxu0
  %369 = vmatprep.mubr.f32.mxu0 0.0
  %370 = vmatmul.mubr.f32.gmra.mxu0 %v108
  %v371 = vpop.f32.mrf.mxu0
  %v372 = vadd.f32 %v101, %v371
  %v373 = vpop.f32.mrf.mxu0
  %374 = vmatprep.mubr.f32.mxu0 0.0
  %375 = vmatmul.mubr.f32.gmra.mxu0 %v111
  %v376 = vpop.f32.mrf.mxu0
  %v377 = vadd.f32 %v101, %v376
  %v378 = vpop.f32.mrf.mxu0
  %379 = vmatprep.mubr.f32.mxu0 0.0
  %380 = vmatmul.mubr.f32.gmra.mxu0 %v114
  %v381 = vpop.f32.mrf.mxu0
  %v382 = vadd.f32 %v101, %v381
  %v383 = vpop.f32.mrf.mxu0
  %384 = vmatprep.mubr.f32.mxu0 0.0
  %385 = vmatmul.mubr.f32.gmra.mxu0 %v117
  %v386 = vpop.f32.mrf.mxu0
  %v387 = vadd.f32 %v101, %v386
  %v388 = vpop.f32.mrf.mxu0
  %389 = vmatprep.mubr.f32.mxu0 0.0
  %390 = vmatmul.mubr.f32.gmra.mxu0 %v120
  %v391 = vpop.f32.mrf.mxu0
  %v392 = vadd.f32 %v101, %v391
  %v393 = vpop.f32.mrf.mxu0
  %394 = vmatprep.mubr.f32.mxu0 0.0
  %395 = vmatmul.mubr.f32.gmra.mxu0 %v123
  %v396 = vpop.f32.mrf.mxu0
  %v397 = vadd.f32 %v101, %v396
  %v398 = vpop.f32.mrf.mxu0
  %399 = vmatprep.mubr.f32.mxu0 0.0
  %400 = vmatmul.mubr.f32.gmra.mxu0 %v126
  %v401 = vpop.f32.mrf.mxu0
  %v402 = vadd.f32 %v101, %v401
  %v403 = vpop.f32.mrf.mxu0
  %404 = vmatprep.mubr.f32.mxu0 0.0
  %405 = vmatmul.mubr.f32.gmra.mxu0 %v129
  %v406 = vpop.f32.mrf.mxu0
  %v407 = vadd.f32 %v101, %v406
  %v408 = vpop.f32.mrf.mxu0
  %409 = vmatprep.mubr.f32.mxu0 0.0
  %410 = vmatmul.mubr.f32.gmra.mxu0 %v132
  %v411 = vpop.f32.mrf.mxu0
  %v412 = vadd.f32 %v101, %v411
  %v413 = vpop.f32.mrf.mxu0
  %414 = vmatprep.mubr.f32.mxu0 0.0
  %415 = vmatmul.mubr.f32.gmra.mxu0 %v135
  %v416 = vpop.f32.mrf.mxu0
  %v417 = vadd.f32 %v101, %v416
  %v418 = vpop.f32.mrf.mxu0
  %419 = vmatprep.mubr.f32.mxu0 0.0
  %420 = vmatmul.mubr.f32.gmra.mxu0 %v138
  %v421 = vpop.f32.mrf.mxu0
  %v422 = vadd.f32 %v101, %v421
  %v423 = vpop.f32.mrf.mxu0
  %424 = vmatprep.mubr.f32.mxu0 0.0
  %425 = vmatmul.mubr.f32.gmra.mxu0 %v141
  %v426 = vpop.f32.mrf.mxu0
  %v427 = vadd.f32 %v101, %v426
  %v428 = vpop.f32.mrf.mxu0
  %429 = vmatprep.mubr.f32.mxu0 0.0
  %430 = vmatmul.mubr.f32.gmra.mxu0 %v144
  %v431 = vpop.f32.mrf.mxu0
  %v432 = vadd.f32 %v101, %v431
  %v433 = vpop.f32.mrf.mxu0
  %434 = vmatprep.mubr.f32.mxu0 0.0
  %435 = vmatmul.mubr.f32.gmra.mxu0 %v147
  %v436 = vpop.f32.mrf.mxu0
  %v437 = vadd.f32 %v101, %v436
  %v438 = vpop.f32.mrf.mxu0
  %439 = vmatprep.mubr.f32.mxu0 0.0
  %440 = vmatmul.mubr.f32.gmra.mxu0 %v150
  %v441 = vpop.f32.mrf.mxu0
  %v442 = vadd.f32 %v101, %v441
  %v443 = vpop.f32.mrf.mxu0
  %444 = vmatprep.mubr.f32.mxu0 0.0
  %445 = vmatmul.mubr.f32.gmra.mxu0 %v153
  %v446 = vpop.f32.mrf.mxu0
  %v447 = vadd.f32 %v101, %v446
  %v448 = vpop.f32.mrf.mxu0
  %449 = vmatprep.mubr.f32.mxu0 0.0
  %450 = vmatmul.mubr.f32.gmra.mxu0 %v156
  %v451 = vpop.f32.mrf.mxu0
  %v452 = vadd.f32 %v101, %v451
  %v453 = vpop.f32.mrf.mxu0
  %454 = vmatprep.mubr.f32.mxu0 0.0
  %455 = vmatmul.mubr.f32.gmra.mxu0 %v159
  %v456 = vpop.f32.mrf.mxu0
  %v457 = vadd.f32 %v101, %v456
  %v458 = vpop.f32.mrf.mxu0
  %459 = vmatprep.mubr.f32.mxu0 0.0
  %460 = vmatmul.mubr.f32.gmra.mxu0 %v162
  %v461 = vpop.f32.mrf.mxu0
  %v462 = vadd.f32 %v101, %v461
  %v463 = vpop.f32.mrf.mxu0
  %464 = vmatprep.mubr.f32.mxu0 0.0
  %465 = vmatmul.mubr.f32.gmra.mxu0 %v165
  %v466 = vpop.f32.mrf.mxu0
  %v467 = vadd.f32 %v101, %v466
  %v468 = vpop.f32.mrf.mxu0
  %469 = vmatprep.mubr.f32.mxu0 0.0
  %470 = vmatmul.mubr.f32.gmra.mxu0 %v168
  %v471 = vpop.f32.mrf.mxu0
  %v472 = vadd.f32 %v101, %v471
  %v473 = vpop.f32.mrf.mxu0
  %474 = vmatprep.mubr.f32.mxu0 0.0
  %475 = vmatmul.mubr.f32.gmra.mxu0 %v171
  %v476 = vpop.f32.mrf.mxu0
  %v477 = vadd.f32 %v101, %v476
  %v478 = vpop.f32.mrf.mxu0
  %479 = vmatprep.mubr.f32.mxu0 0.0
  %480 = vmatmul.mubr.f32.gmra.mxu0 %v174
  %v481 = vpop.f32.mrf.mxu0
  %v482 = vadd.f32 %v101, %v481
  %v483 = vpop.f32.mrf.mxu0
  %484 = vmatprep.mubr.f32.mxu0 0.0
  %485 = vmatmul.mubr.f32.gmra.mxu0 %v177
  %v486 = vpop.f32.mrf.mxu0
  %v487 = vadd.f32 %v101, %v486
  %v488 = vpop.f32.mrf.mxu0
  %489 = vmatprep.mubr.f32.mxu0 0.0
  %490 = vmatmul.mubr.f32.gmra.mxu0 %v180
  %v491 = vpop.f32.mrf.mxu0
  %v492 = vadd.f32 %v101, %v491
  %v493 = vpop.f32.mrf.mxu0
  %494 = vmatprep.mubr.f32.mxu0 0.0
  %495 = vmatmul.mubr.f32.gmra.mxu0 %v183
  %v496 = vpop.f32.mrf.mxu0
  %v497 = vadd.f32 %v101, %v496
  %v498 = vpop.f32.mrf.mxu0
  %499 = vmatprep.mubr.f32.mxu0 0.0
  %500 = vmatmul.mubr.f32.gmra.mxu0 %v186
  %v501 = vpop.f32.mrf.mxu0
  %v502 = vadd.f32 %v101, %v501
  %v503 = vpop.f32.mrf.mxu0
  %504 = vmatprep.mubr.f32.mxu0 0.0
  %505 = vmatmul.mubr.f32.gmra.mxu0 %v189
  %v506 = vpop.f32.mrf.mxu0
  %v507 = vadd.f32 %v101, %v506
  %v508 = vpop.f32.mrf.mxu0
  %509 = vmatprep.mubr.f32.mxu0 0.0
  %510 = vmatmul.mubr.f32.gmra.mxu0 %v192
  %v511 = vpop.f32.mrf.mxu0
  %v512 = vadd.f32 %v101, %v511
  %v513 = vpop.f32.mrf.mxu0
  %514 = vmatprep.mubr.f32.mxu0 0.0
  %515 = vmatmul.mubr.f32.gmra.mxu0 %v195
  %v516 = vpop.f32.mrf.mxu0
  %v517 = vadd.f32 %v101, %v516
  %v518 = vpop.f32.mrf.mxu0
  %519 = vmatprep.mubr.f32.mxu0 0.0
  %520 = vmatmul.mubr.f32.gmra.mxu0 %v198
  %v521 = vpop.f32.mrf.mxu0
  %v522 = vadd.f32 %v101, %v521
  %v523 = vpop.f32.mrf.mxu0
  %524 = vmatprep.mubr.f32.mxu0 0.0
  %525 = vmatmul.mubr.f32.gmra.mxu0 %v201
  %v526 = vpop.f32.mrf.mxu0
  %v527 = vadd.f32 %v101, %v526
  %v528 = vpop.f32.mrf.mxu0
  %529 = vmatprep.mubr.f32.mxu0 0.0
  %530 = vmatmul.mubr.f32.gmra.mxu0 %v204
  %v531 = vpop.f32.mrf.mxu0
  %v532 = vadd.f32 %v101, %v531
  %v533 = vpop.f32.mrf.mxu0
  %534 = vmatprep.mubr.f32.mxu0 0.0
  %535 = vmatmul.mubr.f32.gmra.mxu0 %v207
  %v536 = vpop.f32.mrf.mxu0
  %v537 = vadd.f32 %v101, %v536
  %v538 = vpop.f32.mrf.mxu0
  %539 = vmatprep.mubr.f32.mxu0 0.0
  %540 = vmatmul.mubr.f32.gmra.mxu0 %v210
  %v541 = vpop.f32.mrf.mxu0
  %v542 = vadd.f32 %v101, %v541
  %v543 = vpop.f32.mrf.mxu0
  %544 = vmatprep.mubr.f32.mxu0 0.0
  %545 = vmatmul.mubr.f32.gmra.mxu0 %v213
  %v546 = vpop.f32.mrf.mxu0
  %v547 = vadd.f32 %v101, %v546
  %v548 = vpop.f32.mrf.mxu0
  %549 = vmatprep.mubr.f32.mxu0 0.0
  %550 = vmatmul.mubr.f32.gmra.mxu0 %v216
  %v551 = vpop.f32.mrf.mxu0
  %v552 = vadd.f32 %v101, %v551
  %v553 = vpop.f32.mrf.mxu0
  %554 = vmatprep.mubr.f32.mxu0 0.0
  %555 = vmatmul.mubr.f32.gmra.mxu0 %v219
  %v556 = vpop.f32.mrf.mxu0
  %v557 = vadd.f32 %v101, %v556
  %v558 = vpop.f32.mrf.mxu0
  %559 = vmatprep.mubr.f32.mxu0 0.0
  %560 = vmatmul.mubr.f32.gmra.mxu0 %v222
  %v561 = vpop.f32.mrf.mxu0
  %v562 = vadd.f32 %v101, %v561
  %v563 = vpop.f32.mrf.mxu0
  %564 = vmatprep.mubr.f32.mxu0 0.0
  %565 = vmatmul.mubr.f32.gmra.mxu0 %v225
  %v566 = vpop.f32.mrf.mxu0
  %v567 = vadd.f32 %v101, %v566
  %v568 = vpop.f32.mrf.mxu0
  %569 = vmatprep.mubr.f32.mxu0 0.0
  %570 = vmatmul.mubr.f32.gmra.mxu0 %v228
  %v571 = vpop.f32.mrf.mxu0
  %v572 = vadd.f32 %v101, %v571
  %v573 = vpop.f32.mrf.mxu0
  %574 = vmatprep.mubr.f32.mxu0 0.0
  %575 = vmatmul.mubr.f32.gmra.mxu0 %v231
  %v576 = vpop.f32.mrf.mxu0
  %v577 = vadd.f32 %v101, %v576
  %v578 = vpop.f32.mrf.mxu0
  %579 = vmatprep.mubr.f32.mxu0 0.0
  %580 = vmatmul.mubr.f32.gmra.mxu0 %v234
  %v581 = vpop.f32.mrf.mxu0
  %v582 = vadd.f32 %v101, %v581
  %v583 = vpop.f32.mrf.mxu0
  %584 = vmatprep.mubr.f32.mxu0 0.0
  %585 = vmatmul.mubr.f32.gmra.mxu0 %v237
  %v586 = vpop.f32.mrf.mxu0
  %v587 = vadd.f32 %v101, %v586
  %v588 = vpop.f32.mrf.mxu0
  %589 = vmatprep.mubr.f32.mxu0 0.0
  %590 = vmatmul.mubr.f32.gmra.mxu0 %v240
  %v591 = vpop.f32.mrf.mxu0
  %v592 = vadd.f32 %v101, %v591
  %v593 = vpop.f32.mrf.mxu0
  %594 = vmatprep.mubr.f32.mxu0 0.0
  %595 = vmatmul.mubr.f32.gmra.mxu0 %v243
  %v596 = vpop.f32.mrf.mxu0
  %v597 = vadd.f32 %v101, %v596
  %v598 = vpop.f32.mrf.mxu0
  %599 = vmatprep.mubr.f32.mxu0 0.0
  %600 = vmatmul.mubr.f32.gmra.mxu0 %v246
  %v601 = vpop.f32.mrf.mxu0
  %v602 = vadd.f32 %v101, %v601
  %v603 = vpop.f32.mrf.mxu0
  %604 = vmatprep.mubr.f32.mxu0 0.0
  %605 = vmatmul.mubr.f32.gmra.mxu0 %v249
  %v606 = vpop.f32.mrf.mxu0
  %v607 = vadd.f32 %v101, %v606
  %v608 = vpop.f32.mrf.mxu0
  %609 = vmatprep.mubr.f32.mxu0 0.0
  %610 = vmatmul.mubr.f32.gmra.mxu0 %v252
  %v611 = vpop.f32.mrf.mxu0
  %v612 = vadd.f32 %v101, %v611
  %v613 = vpop.f32.mrf.mxu0
  %614 = vmatprep.mubr.f32.mxu0 0.0
  %615 = vmatmul.mubr.f32.gmra.mxu0 %v255
  %v616 = vpop.f32.mrf.mxu0
  %v617 = vadd.f32 %v101, %v616
  %v618 = vpop.f32.mrf.mxu0
  %619 = vmatprep.mubr.f32.mxu0 0.0
  %620 = vmatmul.mubr.f32.gmra.mxu0 %v258
  %v621 = vpop.f32.mrf.mxu0
  %v622 = vadd.f32 %v101, %v621
  %v623 = vpop.f32.mrf.mxu0
  %624 = vmatprep.mubr.f32.mxu0 0.0
  %625 = vmatmul.mubr.f32.gmra.mxu0 %v261
  %v626 = vpop.f32.mrf.mxu0
  %v627 = vadd.f32 %v101, %v626
  %v628 = vpop.f32.mrf.mxu0
  %629 = vmatprep.mubr.f32.mxu0 0.0
  %630 = vmatmul.mubr.f32.gmra.mxu0 %v264
  %v631 = vpop.f32.mrf.mxu0
  %v632 = vadd.f32 %v101, %v631
  %v633 = vpop.f32.mrf.mxu0
  %634 = vmatprep.mubr.f32.mxu0 0.0
  %635 = vmatmul.mubr.f32.gmra.mxu0 %v267
  %v636 = vpop.f32.mrf.mxu0
  %v637 = vadd.f32 %v101, %v636
  %v638 = vpop.f32.mrf.mxu0
  %639 = vmatprep.mubr.f32.mxu0 0.0
  %640 = vmatmul.mubr.f32.gmra.mxu0 %v270
  %v641 = vpop.f32.mrf.mxu0
  %v642 = vadd.f32 %v101, %v641
  %v643 = vpop.f32.mrf.mxu0
  %644 = vmatprep.mubr.f32.mxu0 0.0
  %645 = vmatmul.mubr.f32.gmra.mxu0 %v273
  %v646 = vpop.f32.mrf.mxu0
  %v647 = vadd.f32 %v101, %v646
  %v648 = vpop.f32.mrf.mxu0
  %649 = vmatprep.mubr.f32.mxu0 0.0
  %650 = vmatmul.mubr.f32.gmra.mxu0 %v276
  %v651 = vpop.f32.mrf.mxu0
  %v652 = vadd.f32 %v101, %v651
  %v653 = vpop.f32.mrf.mxu0
  %654 = vmatprep.mubr.f32.mxu0 0.0
  %655 = vmatmul.mubr.f32.gmra.mxu0 %v279
  %v656 = vpop.f32.mrf.mxu0
  %v657 = vadd.f32 %v101, %v656
  %v658 = vpop.f32.mrf.mxu0
  %659 = vmatprep.mubr.f32.mxu0 0.0
  %660 = vmatmul.mubr.f32.gmra.mxu0 %v282
  %v661 = vpop.f32.mrf.mxu0
  %v662 = vadd.f32 %v101, %v661
  %v663 = vpop.f32.mrf.mxu0
  %664 = vmatprep.mubr.f32.mxu0 0.0
  %665 = vmatmul.mubr.f32.gmra.mxu0 %v285
  %v666 = vpop.f32.mrf.mxu0
  %v667 = vadd.f32 %v101, %v666
  %v668 = vpop.f32.mrf.mxu0
  %669 = vmatprep.mubr.f32.mxu0 0.0
  %670 = vmatmul.mubr.f32.gmra.mxu0 %v288
  %v671 = vpop.f32.mrf.mxu0
  %v672 = vadd.f32 %v101, %v671
  %v673 = vpop.f32.mrf.mxu0
  %674 = vmatprep.mubr.f32.mxu0 0.0
  %675 = vmatmul.mubr.f32.gmra.mxu0 %v291
  %v676 = vpop.f32.mrf.mxu0
  %v677 = vadd.f32 %v101, %v676
  %v678 = vpop.f32.mrf.mxu0
  %679 = vmatprep.mubr.f32.mxu0 0.0
  %680 = vmatmul.mubr.f32.gmra.mxu0 %v294
  %v681 = vpop.f32.mrf.mxu0
  %v682 = vadd.f32 %v101, %v681
  %v683 = vpop.f32.mrf.mxu0
  %684 = vdwg.mxu0
  %vm685 = vcmp.gt.f32.partialorder %v367, 0.0
  %vm686 = vcmp.gt.f32.partialorder %v372, 0.0
  %vm687 = vcmp.gt.f32.partialorder %v377, 0.0
  %vm688 = vcmp.gt.f32.partialorder %v382, 0.0
  %vm689 = vcmp.gt.f32.partialorder %v387, 0.0
  %vm690 = vcmp.gt.f32.partialorder %v392, 0.0
  %vm691 = vcmp.gt.f32.partialorder %v397, 0.0
  %vm692 = vcmp.gt.f32.partialorder %v402, 0.0
  %vm693 = vcmp.gt.f32.partialorder %v407, 0.0
  %vm694 = vcmp.gt.f32.partialorder %v412, 0.0
  %vm695 = vcmp.gt.f32.partialorder %v417, 0.0
  %vm696 = vcmp.gt.f32.partialorder %v422, 0.0
  %vm697 = vcmp.gt.f32.partialorder %v427, 0.0
  %vm698 = vcmp.gt.f32.partialorder %v432, 0.0
  %vm699 = vcmp.gt.f32.partialorder %v437, 0.0
  %vm700 = vcmp.gt.f32.partialorder %v442, 0.0
  %vm701 = vcmp.gt.f32.partialorder %v447, 0.0
  %vm702 = vcmp.gt.f32.partialorder %v452, 0.0
  %vm703 = vcmp.gt.f32.partialorder %v457, 0.0
  %vm704 = vcmp.gt.f32.partialorder %v462, 0.0
  %vm705 = vcmp.gt.f32.partialorder %v467, 0.0
  %vm706 = vcmp.gt.f32.partialorder %v472, 0.0
  %vm707 = vcmp.gt.f32.partialorder %v477, 0.0
  %vm708 = vcmp.gt.f32.partialorder %v482, 0.0
  %vm709 = vcmp.gt.f32.partialorder %v487, 0.0
  %vm710 = vcmp.gt.f32.partialorder %v492, 0.0
  %vm711 = vcmp.gt.f32.partialorder %v497, 0.0
  %vm712 = vcmp.gt.f32.partialorder %v502, 0.0
  %vm713 = vcmp.gt.f32.partialorder %v507, 0.0
  %vm714 = vcmp.gt.f32.partialorder %v512, 0.0
  %vm715 = vcmp.gt.f32.partialorder %v517, 0.0
  %vm716 = vcmp.gt.f32.partialorder %v522, 0.0
  %vm717 = vcmp.gt.f32.partialorder %v527, 0.0
  %vm718 = vcmp.gt.f32.partialorder %v532, 0.0
  %vm719 = vcmp.gt.f32.partialorder %v537, 0.0
  %vm720 = vcmp.gt.f32.partialorder %v542, 0.0
  %vm721 = vcmp.gt.f32.partialorder %v547, 0.0
  %vm722 = vcmp.gt.f32.partialorder %v552, 0.0
  %vm723 = vcmp.gt.f32.partialorder %v557, 0.0
  %vm724 = vcmp.gt.f32.partialorder %v562, 0.0
  %vm725 = vcmp.gt.f32.partialorder %v567, 0.0
  %vm726 = vcmp.gt.f32.partialorder %v572, 0.0
  %vm727 = vcmp.gt.f32.partialorder %v577, 0.0
  %vm728 = vcmp.gt.f32.partialorder %v582, 0.0
  %vm729 = vcmp.gt.f32.partialorder %v587, 0.0
  %vm730 = vcmp.gt.f32.partialorder %v592, 0.0
  %vm731 = vcmp.gt.f32.partialorder %v597, 0.0
  %vm732 = vcmp.gt.f32.partialorder %v602, 0.0
  %vm733 = vcmp.gt.f32.partialorder %v607, 0.0
  %vm734 = vcmp.gt.f32.partialorder %v612, 0.0
  %vm735 = vcmp.gt.f32.partialorder %v617, 0.0
  %vm736 = vcmp.gt.f32.partialorder %v622, 0.0
  %vm737 = vcmp.gt.f32.partialorder %v627, 0.0
  %vm738 = vcmp.gt.f32.partialorder %v632, 0.0
  %vm739 = vcmp.gt.f32.partialorder %v637, 0.0
  %vm740 = vcmp.gt.f32.partialorder %v642, 0.0
  %vm741 = vcmp.gt.f32.partialorder %v647, 0.0
  %vm742 = vcmp.gt.f32.partialorder %v652, 0.0
  %vm743 = vcmp.gt.f32.partialorder %v657, 0.0
  %vm744 = vcmp.gt.f32.partialorder %v662, 0.0
  %vm745 = vcmp.gt.f32.partialorder %v667, 0.0
  %vm746 = vcmp.gt.f32.partialorder %v672, 0.0
  %vm747 = vcmp.gt.f32.partialorder %v677, 0.0
  %vm748 = vcmp.gt.f32.partialorder %v682, 0.0
  %v749 = vmul.f32 %v367, 0.2
  %v750 = vmul.f32 %v372, 0.2
  %v751 = vmul.f32 %v377, 0.2
  %v752 = vmul.f32 %v382, 0.2
  %v753 = vmul.f32 %v387, 0.2
  %v754 = vmul.f32 %v392, 0.2
  %v755 = vmul.f32 %v397, 0.2
  %v756 = vmul.f32 %v402, 0.2
  %v757 = vmul.f32 %v407, 0.2
  %v758 = vmul.f32 %v412, 0.2
  %v759 = vmul.f32 %v417, 0.2
  %v760 = vmul.f32 %v422, 0.2
  %v761 = vmul.f32 %v427, 0.2
  %v762 = vmul.f32 %v432, 0.2
  %v763 = vmul.f32 %v437, 0.2
  %v764 = vmul.f32 %v442, 0.2
  %v765 = vmul.f32 %v447, 0.2
  %v766 = vmul.f32 %v452, 0.2
  %v767 = vmul.f32 %v457, 0.2
  %v768 = vmul.f32 %v462, 0.2
  %v769 = vmul.f32 %v467, 0.2
  %v770 = vmul.f32 %v472, 0.2
  %v771 = vmul.f32 %v477, 0.2
  %v772 = vmul.f32 %v482, 0.2
  %v773 = vmul.f32 %v487, 0.2
  %v774 = vmul.f32 %v492, 0.2
  %v775 = vmul.f32 %v497, 0.2
  %v776 = vmul.f32 %v502, 0.2
  %v777 = vmul.f32 %v507, 0.2
  %v778 = vmul.f32 %v512, 0.2
  %v779 = vmul.f32 %v517, 0.2
  %v780 = vmul.f32 %v522, 0.2
  %v781 = vmul.f32 %v527, 0.2
  %v782 = vmul.f32 %v532, 0.2
  %v783 = vmul.f32 %v537, 0.2
  %v784 = vmul.f32 %v542, 0.2
  %v785 = vmul.f32 %v547, 0.2
  %v786 = vmul.f32 %v552, 0.2
  %v787 = vmul.f32 %v557, 0.2
  %v788 = vmul.f32 %v562, 0.2
  %v789 = vmul.f32 %v567, 0.2
  %v790 = vmul.f32 %v572, 0.2
  %v791 = vmul.f32 %v577, 0.2
  %v792 = vmul.f32 %v582, 0.2
  %v793 = vmul.f32 %v587, 0.2
  %v794 = vmul.f32 %v592, 0.2
  %v795 = vmul.f32 %v597, 0.2
  %v796 = vmul.f32 %v602, 0.2
  %v797 = vmul.f32 %v607, 0.2
  %v798 = vmul.f32 %v612, 0.2
  %v799 = vmul.f32 %v617, 0.2
  %v800 = vmul.f32 %v622, 0.2
  %v801 = vmul.f32 %v627, 0.2
  %v802 = vmul.f32 %v632, 0.2
  %v803 = vmul.f32 %v637, 0.2
  %v804 = vmul.f32 %v642, 0.2
  %v805 = vmul.f32 %v647, 0.2
  %v806 = vmul.f32 %v652, 0.2
  %v807 = vmul.f32 %v657, 0.2
  %v808 = vmul.f32 %v662, 0.2
  %v809 = vmul.f32 %v667, 0.2
  %v810 = vmul.f32 %v672, 0.2
  %v811 = vmul.f32 %v677, 0.2
  %v812 = vmul.f32 %v682, 0.2
  %v813 = vsel %vm685, %v367, %v749
  %v814 = vsel %vm686, %v372, %v750
  %v815 = vsel %vm687, %v377, %v751
  %v816 = vsel %vm688, %v382, %v752
  %v817 = vsel %vm689, %v387, %v753
  %v818 = vsel %vm690, %v392, %v754
  %v819 = vsel %vm691, %v397, %v755
  %v820 = vsel %vm692, %v402, %v756
  %v821 = vsel %vm693, %v407, %v757
  %v822 = vsel %vm694, %v412, %v758
  %v823 = vsel %vm695, %v417, %v759
  %v824 = vsel %vm696, %v422, %v760
  %v825 = vsel %vm697, %v427, %v761
  %v826 = vsel %vm698, %v432, %v762
  %v827 = vsel %vm699, %v437, %v763
  %v828 = vsel %vm700, %v442, %v764
  %v829 = vsel %vm701, %v447, %v765
  %v830 = vsel %vm702, %v452, %v766
  %v831 = vsel %vm703, %v457, %v767
  %v832 = vsel %vm704, %v462, %v768
  %v833 = vsel %vm705, %v467, %v769
  %v834 = vsel %vm706, %v472, %v770
  %v835 = vsel %vm707, %v477, %v771
  %v836 = vsel %vm708, %v482, %v772
  %v837 = vsel %vm709, %v487, %v773
  %v838 = vsel %vm710, %v492, %v774
  %v839 = vsel %vm711, %v497, %v775
  %v840 = vsel %vm712, %v502, %v776
  %v841 = vsel %vm713, %v507, %v777
  %v842 = vsel %vm714, %v512, %v778
  %v843 = vsel %vm715, %v517, %v779
  %v844 = vsel %vm716, %v522, %v780
  %v845 = vsel %vm717, %v527, %v781
  %v846 = vsel %vm718, %v532, %v782
  %v847 = vsel %vm719, %v537, %v783
  %v848 = vsel %vm720, %v542, %v784
  %v849 = vsel %vm721, %v547, %v785
  %v850 = vsel %vm722, %v552, %v786
  %v851 = vsel %vm723, %v557, %v787
  %v852 = vsel %vm724, %v562, %v788
  %v853 = vsel %vm725, %v567, %v789
  %v854 = vsel %vm726, %v572, %v790
  %v855 = vsel %vm727, %v577, %v791
  %v856 = vsel %vm728, %v582, %v792
  %v857 = vsel %vm729, %v587, %v793
  %v858 = vsel %vm730, %v592, %v794
  %v859 = vsel %vm731, %v597, %v795
  %v860 = vsel %vm732, %v602, %v796
  %v861 = vsel %vm733, %v607, %v797
  %v862 = vsel %vm734, %v612, %v798
  %v863 = vsel %vm735, %v617, %v799
  %v864 = vsel %vm736, %v622, %v800
  %v865 = vsel %vm737, %v627, %v801
  %v866 = vsel %vm738, %v632, %v802
  %v867 = vsel %vm739, %v637, %v803
  %v868 = vsel %vm740, %v642, %v804
  %v869 = vsel %vm741, %v647, %v805
  %v870 = vsel %vm742, %v652, %v806
  %v871 = vsel %vm743, %v657, %v807
  %v872 = vsel %vm744, %v662, %v808
  %v873 = vsel %vm745, %v667, %v809
  %v874 = vsel %vm746, %v672, %v810
  %v875 = vsel %vm747, %v677, %v811
  %v876 = vsel %vm748, %v682, %v812
  %v877 = vld [vmem:[%s3] sm:$0xff]
  %v878 = vld [vmem:[%s3 + $0x8] sm:$0xff]
  %v879 = vld [vmem:[%s3 + $0x10] sm:$0xff]
  %v880 = vld [vmem:[%s3 + $0x18] sm:$0xff]
  %v881 = vld [vmem:[%s3 + $0x20] sm:$0xff]
  %v882 = vld [vmem:[%s3 + $0x28] sm:$0xff]
  %v883 = vld [vmem:[%s3 + $0x30] sm:$0xff]
  %v884 = vld [vmem:[%s3 + $0x38] sm:$0xff]
  %v885 = vld [vmem:[%s4] sm:$0x1]
  %v887 = vlaneseq
  %v888 = vshrl.u32 %v887, 7
  %v889 = vsub.s32 0, %v888
  %v890 = vrot.slane %v885, %v889
  %vm892 = vcmask 523264
  %v894 = vsel %vm892, %v813, 0
  %v897 = vsel %vm892, %v814, 0
  %v900 = vsel %vm892, %v815, 0
  %v903 = vsel %vm892, %v816, 0
  %v906 = vsel %vm892, %v817, 0
  %v909 = vsel %vm892, %v818, 0
  %v912 = vsel %vm892, %v819, 0
  %v915 = vsel %vm892, %v820, 0
  %v918 = vsel %vm892, %v821, 0
  %v921 = vsel %vm892, %v822, 0
  %v924 = vsel %vm892, %v823, 0
  %v927 = vsel %vm892, %v824, 0
  %v930 = vsel %vm892, %v825, 0
  %v933 = vsel %vm892, %v826, 0
  %v936 = vsel %vm892, %v827, 0
  %v939 = vsel %vm892, %v828, 0
  %v942 = vsel %vm892, %v829, 0
  %v945 = vsel %vm892, %v830, 0
  %v948 = vsel %vm892, %v831, 0
  %v951 = vsel %vm892, %v832, 0
  %v954 = vsel %vm892, %v833, 0
  %v957 = vsel %vm892, %v834, 0
  %v960 = vsel %vm892, %v835, 0
  %v963 = vsel %vm892, %v836, 0
  %v966 = vsel %vm892, %v837, 0
  %v969 = vsel %vm892, %v838, 0
  %v972 = vsel %vm892, %v839, 0
  %v975 = vsel %vm892, %v840, 0
  %v978 = vsel %vm892, %v841, 0
  %v981 = vsel %vm892, %v842, 0
  %v984 = vsel %vm892, %v843, 0
  %v987 = vsel %vm892, %v844, 0
  %v990 = vsel %vm892, %v845, 0
  %v993 = vsel %vm892, %v846, 0
  %v996 = vsel %vm892, %v847, 0
  %v999 = vsel %vm892, %v848, 0
  %v1002 = vsel %vm892, %v849, 0
  %v1005 = vsel %vm892, %v850, 0
  %v1008 = vsel %vm892, %v851, 0
  %v1011 = vsel %vm892, %v852, 0
  %v1014 = vsel %vm892, %v853, 0
  %v1017 = vsel %vm892, %v854, 0
  %v1020 = vsel %vm892, %v855, 0
  %v1023 = vsel %vm892, %v856, 0
  %v1026 = vsel %vm892, %v857, 0
  %v1029 = vsel %vm892, %v858, 0
  %v1032 = vsel %vm892, %v859, 0
  %v1035 = vsel %vm892, %v860, 0
  %v1038 = vsel %vm892, %v861, 0
  %v1041 = vsel %vm892, %v862, 0
  %v1044 = vsel %vm892, %v863, 0
  %v1047 = vsel %vm892, %v864, 0
  %v1050 = vsel %vm892, %v865, 0
  %v1053 = vsel %vm892, %v866, 0
  %v1056 = vsel %vm892, %v867, 0
  %v1059 = vsel %vm892, %v868, 0
  %v1062 = vsel %vm892, %v869, 0
  %v1065 = vsel %vm892, %v870, 0
  %v1068 = vsel %vm892, %v871, 0
  %v1071 = vsel %vm892, %v872, 0
  %v1074 = vsel %vm892, %v873, 0
  %v1077 = vsel %vm892, %v874, 0
  %v1080 = vsel %vm892, %v875, 0
  %v1083 = vsel %vm892, %v876, 0
  %1085 = vmatprep.subr.mxu0 0.0
  %1086 = vmatpush1.msra.mxu0 0.0
  %1087 = vmatprep.subr.mxu0 0.0
  %1088 = vmatpush1.msra.mxu0 0.0
  %1089 = vmatprep.subr.mxu0 0.0
  %1090 = vmatpush1.msra.mxu0 0.0
  %1091 = vmatprep.subr.mxu0 0.0
  %1092 = vmatpush1.msra.mxu0 0.0
  %1093 = vmatprep.subr.mxu0 0.0
  %1094 = vmatpush1.msra.mxu0 0.0
  %1095 = vmatprep.subr.mxu0 0.0
  %1096 = vmatpush1.msra.mxu0 0.0
  %1097 = vmatprep.subr.mxu0 0.0
  %1098 = vmatpush1.msra.mxu0 0.0
  %1099 = vmatprep.subr.mxu0 0.0
  %1100 = vmatpush1.msra.mxu0 0.0
  %1101 = vmatprep.subr.mxu0 0.0
  %1102 = vmatpush1.msra.mxu0 %v884
  %1103 = vmatprep.subr.mxu0 0.0
  %1104 = vmatpush1.msra.mxu0 %v883
  %1105 = vmatprep.subr.mxu0 0.0
  %1106 = vmatpush1.msra.mxu0 %v882
  %1107 = vmatprep.subr.mxu0 0.0
  %1108 = vmatpush1.msra.mxu0 %v881
  %1109 = vmatprep.subr.mxu0 0.0
  %1110 = vmatpush1.msra.mxu0 %v880
  %1111 = vmatprep.subr.mxu0 0.0
  %1112 = vmatpush1.msra.mxu0 %v879
  %1113 = vmatprep.subr.mxu0 0.0
  %1114 = vmatpush1.msra.mxu0 %v878
  %1115 = vmatprep.subr.mxu0 0.0
  %1116 = vmatpush1.msra.mxu0 %v877
  %1117 = vmatprep.subr.mxu0 0.0
  %1118 = vmatpush2.msra.mxu0 0.0
  %1119 = vmatprep.subr.mxu0 0.0
  %1120 = vmatpush2.msra.mxu0 0.0
  %1121 = vmatprep.subr.mxu0 0.0
  %1122 = vmatpush2.msra.mxu0 0.0
  %1123 = vmatprep.subr.mxu0 0.0
  %1124 = vmatpush2.msra.mxu0 0.0
  %1125 = vmatprep.subr.mxu0 0.0
  %1126 = vmatpush2.msra.mxu0 0.0
  %1127 = vmatprep.subr.mxu0 0.0
  %1128 = vmatpush2.msra.mxu0 0.0
  %1129 = vmatprep.subr.mxu0 0.0
  %1130 = vmatpush2.msra.mxu0 0.0
  %1131 = vmatprep.subr.mxu0 0.0
  %1132 = vmatpush2.msra.mxu0 0.0
  %1133 = vmatprep.subr.mxu0 0.0
  %1134 = vmatpush2.msra.mxu0 0.0
  %1135 = vmatprep.subr.mxu0 0.0
  %1136 = vmatpush2.msra.mxu0 0.0
  %1137 = vmatprep.subr.mxu0 0.0
  %1138 = vmatpush2.msra.mxu0 0.0
  %1139 = vmatprep.subr.mxu0 0.0
  %1140 = vmatpush2.msra.mxu0 0.0
  %1141 = vmatprep.subr.mxu0 0.0
  %1142 = vmatpush2.msra.mxu0 0.0
  %1143 = vmatprep.subr.mxu0 0.0
  %1144 = vmatpush2.msra.mxu0 0.0
  %1145 = vmatprep.subr.mxu0 0.0
  %1146 = vmatpush2.msra.mxu0 0.0
  %1147 = vmatprep.subr.mxu0 0.0
  %1148 = vmatpush2.msra.mxu0 0.0
  %1149 = vmatprep.mubr.f32.mxu0 0.0
  %1150 = vmatmul.mubr.f32.gmra.mxu0 %v894
  %v1151 = vpop.f32.mrf.mxu0
  %v1152 = vadd.f32 %v890, %v1151
  %v1153 = vpop.f32.mrf.mxu0
  %1154 = vmatprep.mubr.f32.mxu0 0.0
  %1155 = vmatmul.mubr.f32.gmra.mxu0 %v897
  %v1156 = vpop.f32.mrf.mxu0
  %v1157 = vadd.f32 %v890, %v1156
  %v1158 = vpop.f32.mrf.mxu0
  %1159 = vmatprep.mubr.f32.mxu0 0.0
  %1160 = vmatmul.mubr.f32.gmra.mxu0 %v900
  %v1161 = vpop.f32.mrf.mxu0
  %v1162 = vadd.f32 %v890, %v1161
  %v1163 = vpop.f32.mrf.mxu0
  %1164 = vmatprep.mubr.f32.mxu0 0.0
  %1165 = vmatmul.mubr.f32.gmra.mxu0 %v903
  %v1166 = vpop.f32.mrf.mxu0
  %v1167 = vadd.f32 %v890, %v1166
  %v1168 = vpop.f32.mrf.mxu0
  %1169 = vmatprep.mubr.f32.mxu0 0.0
  %1170 = vmatmul.mubr.f32.gmra.mxu0 %v906
  %v1171 = vpop.f32.mrf.mxu0
  %v1172 = vadd.f32 %v890, %v1171
  %v1173 = vpop.f32.mrf.mxu0
  %1174 = vmatprep.mubr.f32.mxu0 0.0
  %1175 = vmatmul.mubr.f32.gmra.mxu0 %v909
  %v1176 = vpop.f32.mrf.mxu0
  %v1177 = vadd.f32 %v890, %v1176
  %v1178 = vpop.f32.mrf.mxu0
  %1179 = vmatprep.mubr.f32.mxu0 0.0
  %1180 = vmatmul.mubr.f32.gmra.mxu0 %v912
  %v1181 = vpop.f32.mrf.mxu0
  %v1182 = vadd.f32 %v890, %v1181
  %v1183 = vpop.f32.mrf.mxu0
  %1184 = vmatprep.mubr.f32.mxu0 0.0
  %1185 = vmatmul.mubr.f32.gmra.mxu0 %v915
  %v1186 = vpop.f32.mrf.mxu0
  %v1187 = vadd.f32 %v890, %v1186
  %v1188 = vpop.f32.mrf.mxu0
  %1189 = vmatprep.mubr.f32.mxu0 0.0
  %1190 = vmatmul.mubr.f32.gmra.mxu0 %v918
  %v1191 = vpop.f32.mrf.mxu0
  %v1192 = vadd.f32 %v890, %v1191
  %v1193 = vpop.f32.mrf.mxu0
  %1194 = vmatprep.mubr.f32.mxu0 0.0
  %1195 = vmatmul.mubr.f32.gmra.mxu0 %v921
  %v1196 = vpop.f32.mrf.mxu0
  %v1197 = vadd.f32 %v890, %v1196
  %v1198 = vpop.f32.mrf.mxu0
  %1199 = vmatprep.mubr.f32.mxu0 0.0
  %1200 = vmatmul.mubr.f32.gmra.mxu0 %v924
  %v1201 = vpop.f32.mrf.mxu0
  %v1202 = vadd.f32 %v890, %v1201
  %v1203 = vpop.f32.mrf.mxu0
  %1204 = vmatprep.mubr.f32.mxu0 0.0
  %1205 = vmatmul.mubr.f32.gmra.mxu0 %v927
  %v1206 = vpop.f32.mrf.mxu0
  %v1207 = vadd.f32 %v890, %v1206
  %v1208 = vpop.f32.mrf.mxu0
  %1209 = vmatprep.mubr.f32.mxu0 0.0
  %1210 = vmatmul.mubr.f32.gmra.mxu0 %v930
  %v1211 = vpop.f32.mrf.mxu0
  %v1212 = vadd.f32 %v890, %v1211
  %v1213 = vpop.f32.mrf.mxu0
  %1214 = vmatprep.mubr.f32.mxu0 0.0
  %1215 = vmatmul.mubr.f32.gmra.mxu0 %v933
  %v1216 = vpop.f32.mrf.mxu0
  %v1217 = vadd.f32 %v890, %v1216
  %v1218 = vpop.f32.mrf.mxu0
  %1219 = vmatprep.mubr.f32.mxu0 0.0
  %1220 = vmatmul.mubr.f32.gmra.mxu0 %v936
  %v1221 = vpop.f32.mrf.mxu0
  %v1222 = vadd.f32 %v890, %v1221
  %v1223 = vpop.f32.mrf.mxu0
  %1224 = vmatprep.mubr.f32.mxu0 0.0
  %1225 = vmatmul.mubr.f32.gmra.mxu0 %v939
  %v1226 = vpop.f32.mrf.mxu0
  %v1227 = vadd.f32 %v890, %v1226
  %v1228 = vpop.f32.mrf.mxu0
  %1229 = vmatprep.mubr.f32.mxu0 0.0
  %1230 = vmatmul.mubr.f32.gmra.mxu0 %v942
  %v1231 = vpop.f32.mrf.mxu0
  %v1232 = vadd.f32 %v890, %v1231
  %v1233 = vpop.f32.mrf.mxu0
  %1234 = vmatprep.mubr.f32.mxu0 0.0
  %1235 = vmatmul.mubr.f32.gmra.mxu0 %v945
  %v1236 = vpop.f32.mrf.mxu0
  %v1237 = vadd.f32 %v890, %v1236
  %v1238 = vpop.f32.mrf.mxu0
  %1239 = vmatprep.mubr.f32.mxu0 0.0
  %1240 = vmatmul.mubr.f32.gmra.mxu0 %v948
  %v1241 = vpop.f32.mrf.mxu0
  %v1242 = vadd.f32 %v890, %v1241
  %v1243 = vpop.f32.mrf.mxu0
  %1244 = vmatprep.mubr.f32.mxu0 0.0
  %1245 = vmatmul.mubr.f32.gmra.mxu0 %v951
  %v1246 = vpop.f32.mrf.mxu0
  %v1247 = vadd.f32 %v890, %v1246
  %v1248 = vpop.f32.mrf.mxu0
  %1249 = vmatprep.mubr.f32.mxu0 0.0
  %1250 = vmatmul.mubr.f32.gmra.mxu0 %v954
  %v1251 = vpop.f32.mrf.mxu0
  %v1252 = vadd.f32 %v890, %v1251
  %v1253 = vpop.f32.mrf.mxu0
  %1254 = vmatprep.mubr.f32.mxu0 0.0
  %1255 = vmatmul.mubr.f32.gmra.mxu0 %v957
  %v1256 = vpop.f32.mrf.mxu0
  %v1257 = vadd.f32 %v890, %v1256
  %v1258 = vpop.f32.mrf.mxu0
  %1259 = vmatprep.mubr.f32.mxu0 0.0
  %1260 = vmatmul.mubr.f32.gmra.mxu0 %v960
  %v1261 = vpop.f32.mrf.mxu0
  %v1262 = vadd.f32 %v890, %v1261
  %v1263 = vpop.f32.mrf.mxu0
  %1264 = vmatprep.mubr.f32.mxu0 0.0
  %1265 = vmatmul.mubr.f32.gmra.mxu0 %v963
  %v1266 = vpop.f32.mrf.mxu0
  %v1267 = vadd.f32 %v890, %v1266
  %v1268 = vpop.f32.mrf.mxu0
  %1269 = vmatprep.mubr.f32.mxu0 0.0
  %1270 = vmatmul.mubr.f32.gmra.mxu0 %v966
  %v1271 = vpop.f32.mrf.mxu0
  %v1272 = vadd.f32 %v890, %v1271
  %v1273 = vpop.f32.mrf.mxu0
  %1274 = vmatprep.mubr.f32.mxu0 0.0
  %1275 = vmatmul.mubr.f32.gmra.mxu0 %v969
  %v1276 = vpop.f32.mrf.mxu0
  %v1277 = vadd.f32 %v890, %v1276
  %v1278 = vpop.f32.mrf.mxu0
  %1279 = vmatprep.mubr.f32.mxu0 0.0
  %1280 = vmatmul.mubr.f32.gmra.mxu0 %v972
  %v1281 = vpop.f32.mrf.mxu0
  %v1282 = vadd.f32 %v890, %v1281
  %v1283 = vpop.f32.mrf.mxu0
  %1284 = vmatprep.mubr.f32.mxu0 0.0
  %1285 = vmatmul.mubr.f32.gmra.mxu0 %v975
  %v1286 = vpop.f32.mrf.mxu0
  %v1287 = vadd.f32 %v890, %v1286
  %v1288 = vpop.f32.mrf.mxu0
  %1289 = vmatprep.mubr.f32.mxu0 0.0
  %1290 = vmatmul.mubr.f32.gmra.mxu0 %v978
  %v1291 = vpop.f32.mrf.mxu0
  %v1292 = vadd.f32 %v890, %v1291
  %v1293 = vpop.f32.mrf.mxu0
  %1294 = vmatprep.mubr.f32.mxu0 0.0
  %1295 = vmatmul.mubr.f32.gmra.mxu0 %v981
  %v1296 = vpop.f32.mrf.mxu0
  %v1297 = vadd.f32 %v890, %v1296
  %v1298 = vpop.f32.mrf.mxu0
  %1299 = vmatprep.mubr.f32.mxu0 0.0
  %1300 = vmatmul.mubr.f32.gmra.mxu0 %v984
  %v1301 = vpop.f32.mrf.mxu0
  %v1302 = vadd.f32 %v890, %v1301
  %v1303 = vpop.f32.mrf.mxu0
  %1304 = vmatprep.mubr.f32.mxu0 0.0
  %1305 = vmatmul.mubr.f32.gmra.mxu0 %v987
  %v1306 = vpop.f32.mrf.mxu0
  %v1307 = vadd.f32 %v890, %v1306
  %v1308 = vpop.f32.mrf.mxu0
  %1309 = vmatprep.mubr.f32.mxu0 0.0
  %1310 = vmatmul.mubr.f32.gmra.mxu0 %v990
  %v1311 = vpop.f32.mrf.mxu0
  %v1312 = vadd.f32 %v890, %v1311
  %v1313 = vpop.f32.mrf.mxu0
  %1314 = vmatprep.mubr.f32.mxu0 0.0
  %1315 = vmatmul.mubr.f32.gmra.mxu0 %v993
  %v1316 = vpop.f32.mrf.mxu0
  %v1317 = vadd.f32 %v890, %v1316
  %v1318 = vpop.f32.mrf.mxu0
  %1319 = vmatprep.mubr.f32.mxu0 0.0
  %1320 = vmatmul.mubr.f32.gmra.mxu0 %v996
  %v1321 = vpop.f32.mrf.mxu0
  %v1322 = vadd.f32 %v890, %v1321
  %v1323 = vpop.f32.mrf.mxu0
  %1324 = vmatprep.mubr.f32.mxu0 0.0
  %1325 = vmatmul.mubr.f32.gmra.mxu0 %v999
  %v1326 = vpop.f32.mrf.mxu0
  %v1327 = vadd.f32 %v890, %v1326
  %v1328 = vpop.f32.mrf.mxu0
  %1329 = vmatprep.mubr.f32.mxu0 0.0
  %1330 = vmatmul.mubr.f32.gmra.mxu0 %v1002
  %v1331 = vpop.f32.mrf.mxu0
  %v1332 = vadd.f32 %v890, %v1331
  %v1333 = vpop.f32.mrf.mxu0
  %1334 = vmatprep.mubr.f32.mxu0 0.0
  %1335 = vmatmul.mubr.f32.gmra.mxu0 %v1005
  %v1336 = vpop.f32.mrf.mxu0
  %v1337 = vadd.f32 %v890, %v1336
  %v1338 = vpop.f32.mrf.mxu0
  %1339 = vmatprep.mubr.f32.mxu0 0.0
  %1340 = vmatmul.mubr.f32.gmra.mxu0 %v1008
  %v1341 = vpop.f32.mrf.mxu0
  %v1342 = vadd.f32 %v890, %v1341
  %v1343 = vpop.f32.mrf.mxu0
  %1344 = vmatprep.mubr.f32.mxu0 0.0
  %1345 = vmatmul.mubr.f32.gmra.mxu0 %v1011
  %v1346 = vpop.f32.mrf.mxu0
  %v1347 = vadd.f32 %v890, %v1346
  %v1348 = vpop.f32.mrf.mxu0
  %1349 = vmatprep.mubr.f32.mxu0 0.0
  %1350 = vmatmul.mubr.f32.gmra.mxu0 %v1014
  %v1351 = vpop.f32.mrf.mxu0
  %v1352 = vadd.f32 %v890, %v1351
  %v1353 = vpop.f32.mrf.mxu0
  %1354 = vmatprep.mubr.f32.mxu0 0.0
  %1355 = vmatmul.mubr.f32.gmra.mxu0 %v1017
  %v1356 = vpop.f32.mrf.mxu0
  %v1357 = vadd.f32 %v890, %v1356
  %v1358 = vpop.f32.mrf.mxu0
  %1359 = vmatprep.mubr.f32.mxu0 0.0
  %1360 = vmatmul.mubr.f32.gmra.mxu0 %v1020
  %v1361 = vpop.f32.mrf.mxu0
  %v1362 = vadd.f32 %v890, %v1361
  %v1363 = vpop.f32.mrf.mxu0
  %1364 = vmatprep.mubr.f32.mxu0 0.0
  %1365 = vmatmul.mubr.f32.gmra.mxu0 %v1023
  %v1366 = vpop.f32.mrf.mxu0
  %v1367 = vadd.f32 %v890, %v1366
  %v1368 = vpop.f32.mrf.mxu0
  %1369 = vmatprep.mubr.f32.mxu0 0.0
  %1370 = vmatmul.mubr.f32.gmra.mxu0 %v1026
  %v1371 = vpop.f32.mrf.mxu0
  %v1372 = vadd.f32 %v890, %v1371
  %v1373 = vpop.f32.mrf.mxu0
  %1374 = vmatprep.mubr.f32.mxu0 0.0
  %1375 = vmatmul.mubr.f32.gmra.mxu0 %v1029
  %v1376 = vpop.f32.mrf.mxu0
  %v1377 = vadd.f32 %v890, %v1376
  %v1378 = vpop.f32.mrf.mxu0
  %1379 = vmatprep.mubr.f32.mxu0 0.0
  %1380 = vmatmul.mubr.f32.gmra.mxu0 %v1032
  %v1381 = vpop.f32.mrf.mxu0
  %v1382 = vadd.f32 %v890, %v1381
  %v1383 = vpop.f32.mrf.mxu0
  %1384 = vmatprep.mubr.f32.mxu0 0.0
  %1385 = vmatmul.mubr.f32.gmra.mxu0 %v1035
  %v1386 = vpop.f32.mrf.mxu0
  %v1387 = vadd.f32 %v890, %v1386
  %v1388 = vpop.f32.mrf.mxu0
  %1389 = vmatprep.mubr.f32.mxu0 0.0
  %1390 = vmatmul.mubr.f32.gmra.mxu0 %v1038
  %v1391 = vpop.f32.mrf.mxu0
  %v1392 = vadd.f32 %v890, %v1391
  %v1393 = vpop.f32.mrf.mxu0
  %1394 = vmatprep.mubr.f32.mxu0 0.0
  %1395 = vmatmul.mubr.f32.gmra.mxu0 %v1041
  %v1396 = vpop.f32.mrf.mxu0
  %v1397 = vadd.f32 %v890, %v1396
  %v1398 = vpop.f32.mrf.mxu0
  %1399 = vmatprep.mubr.f32.mxu0 0.0
  %1400 = vmatmul.mubr.f32.gmra.mxu0 %v1044
  %v1401 = vpop.f32.mrf.mxu0
  %v1402 = vadd.f32 %v890, %v1401
  %v1403 = vpop.f32.mrf.mxu0
  %1404 = vmatprep.mubr.f32.mxu0 0.0
  %1405 = vmatmul.mubr.f32.gmra.mxu0 %v1047
  %v1406 = vpop.f32.mrf.mxu0
  %v1407 = vadd.f32 %v890, %v1406
  %v1408 = vpop.f32.mrf.mxu0
  %1409 = vmatprep.mubr.f32.mxu0 0.0
  %1410 = vmatmul.mubr.f32.gmra.mxu0 %v1050
  %v1411 = vpop.f32.mrf.mxu0
  %v1412 = vadd.f32 %v890, %v1411
  %v1413 = vpop.f32.mrf.mxu0
  %1414 = vmatprep.mubr.f32.mxu0 0.0
  %1415 = vmatmul.mubr.f32.gmra.mxu0 %v1053
  %v1416 = vpop.f32.mrf.mxu0
  %v1417 = vadd.f32 %v890, %v1416
  %v1418 = vpop.f32.mrf.mxu0
  %1419 = vmatprep.mubr.f32.mxu0 0.0
  %1420 = vmatmul.mubr.f32.gmra.mxu0 %v1056
  %v1421 = vpop.f32.mrf.mxu0
  %v1422 = vadd.f32 %v890, %v1421
  %v1423 = vpop.f32.mrf.mxu0
  %1424 = vmatprep.mubr.f32.mxu0 0.0
  %1425 = vmatmul.mubr.f32.gmra.mxu0 %v1059
  %v1426 = vpop.f32.mrf.mxu0
  %v1427 = vadd.f32 %v890, %v1426
  %v1428 = vpop.f32.mrf.mxu0
  %1429 = vmatprep.mubr.f32.mxu0 0.0
  %1430 = vmatmul.mubr.f32.gmra.mxu0 %v1062
  %v1431 = vpop.f32.mrf.mxu0
  %v1432 = vadd.f32 %v890, %v1431
  %v1433 = vpop.f32.mrf.mxu0
  %1434 = vmatprep.mubr.f32.mxu0 0.0
  %1435 = vmatmul.mubr.f32.gmra.mxu0 %v1065
  %v1436 = vpop.f32.mrf.mxu0
  %v1437 = vadd.f32 %v890, %v1436
  %v1438 = vpop.f32.mrf.mxu0
  %1439 = vmatprep.mubr.f32.mxu0 0.0
  %1440 = vmatmul.mubr.f32.gmra.mxu0 %v1068
  %v1441 = vpop.f32.mrf.mxu0
  %v1442 = vadd.f32 %v890, %v1441
  %v1443 = vpop.f32.mrf.mxu0
  %1444 = vmatprep.mubr.f32.mxu0 0.0
  %1445 = vmatmul.mubr.f32.gmra.mxu0 %v1071
  %v1446 = vpop.f32.mrf.mxu0
  %v1447 = vadd.f32 %v890, %v1446
  %v1448 = vpop.f32.mrf.mxu0
  %1449 = vmatprep.mubr.f32.mxu0 0.0
  %1450 = vmatmul.mubr.f32.gmra.mxu0 %v1074
  %v1451 = vpop.f32.mrf.mxu0
  %v1452 = vadd.f32 %v890, %v1451
  %v1453 = vpop.f32.mrf.mxu0
  %1454 = vmatprep.mubr.f32.mxu0 0.0
  %1455 = vmatmul.mubr.f32.gmra.mxu0 %v1077
  %v1456 = vpop.f32.mrf.mxu0
  %v1457 = vadd.f32 %v890, %v1456
  %v1458 = vpop.f32.mrf.mxu0
  %1459 = vmatprep.mubr.f32.mxu0 0.0
  %1460 = vmatmul.mubr.f32.gmra.mxu0 %v1080
  %v1461 = vpop.f32.mrf.mxu0
  %v1462 = vadd.f32 %v890, %v1461
  %v1463 = vpop.f32.mrf.mxu0
  %1464 = vmatprep.mubr.f32.mxu0 0.0
  %1465 = vmatmul.mubr.f32.gmra.mxu0 %v1083
  %v1466 = vpop.f32.mrf.mxu0
  %v1467 = vadd.f32 %v890, %v1466
  %v1468 = vpop.f32.mrf.mxu0
  %1469 = vdwg.mxu0
  %vm1470 = vcmp.gt.f32.partialorder %v1152, 0.0
  %vm1471 = vcmp.gt.f32.partialorder %v1157, 0.0
  %vm1472 = vcmp.gt.f32.partialorder %v1162, 0.0
  %vm1473 = vcmp.gt.f32.partialorder %v1167, 0.0
  %vm1474 = vcmp.gt.f32.partialorder %v1172, 0.0
  %vm1475 = vcmp.gt.f32.partialorder %v1177, 0.0
  %vm1476 = vcmp.gt.f32.partialorder %v1182, 0.0
  %vm1477 = vcmp.gt.f32.partialorder %v1187, 0.0
  %vm1478 = vcmp.gt.f32.partialorder %v1192, 0.0
  %vm1479 = vcmp.gt.f32.partialorder %v1197, 0.0
  %vm1480 = vcmp.gt.f32.partialorder %v1202, 0.0
  %vm1481 = vcmp.gt.f32.partialorder %v1207, 0.0
  %vm1482 = vcmp.gt.f32.partialorder %v1212, 0.0
  %vm1483 = vcmp.gt.f32.partialorder %v1217, 0.0
  %vm1484 = vcmp.gt.f32.partialorder %v1222, 0.0
  %vm1485 = vcmp.gt.f32.partialorder %v1227, 0.0
  %vm1486 = vcmp.gt.f32.partialorder %v1232, 0.0
  %vm1487 = vcmp.gt.f32.partialorder %v1237, 0.0
  %vm1488 = vcmp.gt.f32.partialorder %v1242, 0.0
  %vm1489 = vcmp.gt.f32.partialorder %v1247, 0.0
  %vm1490 = vcmp.gt.f32.partialorder %v1252, 0.0
  %vm1491 = vcmp.gt.f32.partialorder %v1257, 0.0
  %vm1492 = vcmp.gt.f32.partialorder %v1262, 0.0
  %vm1493 = vcmp.gt.f32.partialorder %v1267, 0.0
  %vm1494 = vcmp.gt.f32.partialorder %v1272, 0.0
  %vm1495 = vcmp.gt.f32.partialorder %v1277, 0.0
  %vm1496 = vcmp.gt.f32.partialorder %v1282, 0.0
  %vm1497 = vcmp.gt.f32.partialorder %v1287, 0.0
  %vm1498 = vcmp.gt.f32.partialorder %v1292, 0.0
  %vm1499 = vcmp.gt.f32.partialorder %v1297, 0.0
  %vm1500 = vcmp.gt.f32.partialorder %v1302, 0.0
  %vm1501 = vcmp.gt.f32.partialorder %v1307, 0.0
  %vm1502 = vcmp.gt.f32.partialorder %v1312, 0.0
  %vm1503 = vcmp.gt.f32.partialorder %v1317, 0.0
  %vm1504 = vcmp.gt.f32.partialorder %v1322, 0.0
  %vm1505 = vcmp.gt.f32.partialorder %v1327, 0.0
  %vm1506 = vcmp.gt.f32.partialorder %v1332, 0.0
  %vm1507 = vcmp.gt.f32.partialorder %v1337, 0.0
  %vm1508 = vcmp.gt.f32.partialorder %v1342, 0.0
  %vm1509 = vcmp.gt.f32.partialorder %v1347, 0.0
  %vm1510 = vcmp.gt.f32.partialorder %v1352, 0.0
  %vm1511 = vcmp.gt.f32.partialorder %v1357, 0.0
  %vm1512 = vcmp.gt.f32.partialorder %v1362, 0.0
  %vm1513 = vcmp.gt.f32.partialorder %v1367, 0.0
  %vm1514 = vcmp.gt.f32.partialorder %v1372, 0.0
  %vm1515 = vcmp.gt.f32.partialorder %v1377, 0.0
  %vm1516 = vcmp.gt.f32.partialorder %v1382, 0.0
  %vm1517 = vcmp.gt.f32.partialorder %v1387, 0.0
  %vm1518 = vcmp.gt.f32.partialorder %v1392, 0.0
  %vm1519 = vcmp.gt.f32.partialorder %v1397, 0.0
  %vm1520 = vcmp.gt.f32.partialorder %v1402, 0.0
  %vm1521 = vcmp.gt.f32.partialorder %v1407, 0.0
  %vm1522 = vcmp.gt.f32.partialorder %v1412, 0.0
  %vm1523 = vcmp.gt.f32.partialorder %v1417, 0.0
  %vm1524 = vcmp.gt.f32.partialorder %v1422, 0.0
  %vm1525 = vcmp.gt.f32.partialorder %v1427, 0.0
  %vm1526 = vcmp.gt.f32.partialorder %v1432, 0.0
  %vm1527 = vcmp.gt.f32.partialorder %v1437, 0.0
  %vm1528 = vcmp.gt.f32.partialorder %v1442, 0.0
  %vm1529 = vcmp.gt.f32.partialorder %v1447, 0.0
  %vm1530 = vcmp.gt.f32.partialorder %v1452, 0.0
  %vm1531 = vcmp.gt.f32.partialorder %v1457, 0.0
  %vm1532 = vcmp.gt.f32.partialorder %v1462, 0.0
  %vm1533 = vcmp.gt.f32.partialorder %v1467, 0.0
  %v1534 = vmul.f32 %v1152, 0.2
  %v1535 = vmul.f32 %v1157, 0.2
  %v1536 = vmul.f32 %v1162, 0.2
  %v1537 = vmul.f32 %v1167, 0.2
  %v1538 = vmul.f32 %v1172, 0.2
  %v1539 = vmul.f32 %v1177, 0.2
  %v1540 = vmul.f32 %v1182, 0.2
  %v1541 = vmul.f32 %v1187, 0.2
  %v1542 = vmul.f32 %v1192, 0.2
  %v1543 = vmul.f32 %v1197, 0.2
  %v1544 = vmul.f32 %v1202, 0.2
  %v1545 = vmul.f32 %v1207, 0.2
  %v1546 = vmul.f32 %v1212, 0.2
  %v1547 = vmul.f32 %v1217, 0.2
  %v1548 = vmul.f32 %v1222, 0.2
  %v1549 = vmul.f32 %v1227, 0.2
  %v1550 = vmul.f32 %v1232, 0.2
  %v1551 = vmul.f32 %v1237, 0.2
  %v1552 = vmul.f32 %v1242, 0.2
  %v1553 = vmul.f32 %v1247, 0.2
  %v1554 = vmul.f32 %v1252, 0.2
  %v1555 = vmul.f32 %v1257, 0.2
  %v1556 = vmul.f32 %v1262, 0.2
  %v1557 = vmul.f32 %v1267, 0.2
  %v1558 = vmul.f32 %v1272, 0.2
  %v1559 = vmul.f32 %v1277, 0.2
  %v1560 = vmul.f32 %v1282, 0.2
  %v1561 = vmul.f32 %v1287, 0.2
  %v1562 = vmul.f32 %v1292, 0.2
  %v1563 = vmul.f32 %v1297, 0.2
  %v1564 = vmul.f32 %v1302, 0.2
  %v1565 = vmul.f32 %v1307, 0.2
  %v1566 = vmul.f32 %v1312, 0.2
  %v1567 = vmul.f32 %v1317, 0.2
  %v1568 = vmul.f32 %v1322, 0.2
  %v1569 = vmul.f32 %v1327, 0.2
  %v1570 = vmul.f32 %v1332, 0.2
  %v1571 = vmul.f32 %v1337, 0.2
  %v1572 = vmul.f32 %v1342, 0.2
  %v1573 = vmul.f32 %v1347, 0.2
  %v1574 = vmul.f32 %v1352, 0.2
  %v1575 = vmul.f32 %v1357, 0.2
  %v1576 = vmul.f32 %v1362, 0.2
  %v1577 = vmul.f32 %v1367, 0.2
  %v1578 = vmul.f32 %v1372, 0.2
  %v1579 = vmul.f32 %v1377, 0.2
  %v1580 = vmul.f32 %v1382, 0.2
  %v1581 = vmul.f32 %v1387, 0.2
  %v1582 = vmul.f32 %v1392, 0.2
  %v1583 = vmul.f32 %v1397, 0.2
  %v1584 = vmul.f32 %v1402, 0.2
  %v1585 = vmul.f32 %v1407, 0.2
  %v1586 = vmul.f32 %v1412, 0.2
  %v1587 = vmul.f32 %v1417, 0.2
  %v1588 = vmul.f32 %v1422, 0.2
  %v1589 = vmul.f32 %v1427, 0.2
  %v1590 = vmul.f32 %v1432, 0.2
  %v1591 = vmul.f32 %v1437, 0.2
  %v1592 = vmul.f32 %v1442, 0.2
  %v1593 = vmul.f32 %v1447, 0.2
  %v1594 = vmul.f32 %v1452, 0.2
  %v1595 = vmul.f32 %v1457, 0.2
  %v1596 = vmul.f32 %v1462, 0.2
  %v1597 = vmul.f32 %v1467, 0.2
  %v1598 = vsel %vm1470, %v1152, %v1534
  %v1599 = vsel %vm1471, %v1157, %v1535
  %v1600 = vsel %vm1472, %v1162, %v1536
  %v1601 = vsel %vm1473, %v1167, %v1537
  %v1602 = vsel %vm1474, %v1172, %v1538
  %v1603 = vsel %vm1475, %v1177, %v1539
  %v1604 = vsel %vm1476, %v1182, %v1540
  %v1605 = vsel %vm1477, %v1187, %v1541
  %v1606 = vsel %vm1478, %v1192, %v1542
  %v1607 = vsel %vm1479, %v1197, %v1543
  %v1608 = vsel %vm1480, %v1202, %v1544
  %v1609 = vsel %vm1481, %v1207, %v1545
  %v1610 = vsel %vm1482, %v1212, %v1546
  %v1611 = vsel %vm1483, %v1217, %v1547
  %v1612 = vsel %vm1484, %v1222, %v1548
  %v1613 = vsel %vm1485, %v1227, %v1549
  %v1614 = vsel %vm1486, %v1232, %v1550
  %v1615 = vsel %vm1487, %v1237, %v1551
  %v1616 = vsel %vm1488, %v1242, %v1552
  %v1617 = vsel %vm1489, %v1247, %v1553
  %v1618 = vsel %vm1490, %v1252, %v1554
  %v1619 = vsel %vm1491, %v1257, %v1555
  %v1620 = vsel %vm1492, %v1262, %v1556
  %v1621 = vsel %vm1493, %v1267, %v1557
  %v1622 = vsel %vm1494, %v1272, %v1558
  %v1623 = vsel %vm1495, %v1277, %v1559
  %v1624 = vsel %vm1496, %v1282, %v1560
  %v1625 = vsel %vm1497, %v1287, %v1561
  %v1626 = vsel %vm1498, %v1292, %v1562
  %v1627 = vsel %vm1499, %v1297, %v1563
  %v1628 = vsel %vm1500, %v1302, %v1564
  %v1629 = vsel %vm1501, %v1307, %v1565
  %v1630 = vsel %vm1502, %v1312, %v1566
  %v1631 = vsel %vm1503, %v1317, %v1567
  %v1632 = vsel %vm1504, %v1322, %v1568
  %v1633 = vsel %vm1505, %v1327, %v1569
  %v1634 = vsel %vm1506, %v1332, %v1570
  %v1635 = vsel %vm1507, %v1337, %v1571
  %v1636 = vsel %vm1508, %v1342, %v1572
  %v1637 = vsel %vm1509, %v1347, %v1573
  %v1638 = vsel %vm1510, %v1352, %v1574
  %v1639 = vsel %vm1511, %v1357, %v1575
  %v1640 = vsel %vm1512, %v1362, %v1576
  %v1641 = vsel %vm1513, %v1367, %v1577
  %v1642 = vsel %vm1514, %v1372, %v1578
  %v1643 = vsel %vm1515, %v1377, %v1579
  %v1644 = vsel %vm1516, %v1382, %v1580
  %v1645 = vsel %vm1517, %v1387, %v1581
  %v1646 = vsel %vm1518, %v1392, %v1582
  %v1647 = vsel %vm1519, %v1397, %v1583
  %v1648 = vsel %vm1520, %v1402, %v1584
  %v1649 = vsel %vm1521, %v1407, %v1585
  %v1650 = vsel %vm1522, %v1412, %v1586
  %v1651 = vsel %vm1523, %v1417, %v1587
  %v1652 = vsel %vm1524, %v1422, %v1588
  %v1653 = vsel %vm1525, %v1427, %v1589
  %v1654 = vsel %vm1526, %v1432, %v1590
  %v1655 = vsel %vm1527, %v1437, %v1591
  %v1656 = vsel %vm1528, %v1442, %v1592
  %v1657 = vsel %vm1529, %v1447, %v1593
  %v1658 = vsel %vm1530, %v1452, %v1594
  %v1659 = vsel %vm1531, %v1457, %v1595
  %v1660 = vsel %vm1532, %v1462, %v1596
  %v1661 = vsel %vm1533, %v1467, %v1597
  %v1662 = vld [vmem:[%s5] sm:$0xff]
  %s1663 = sld [smem:[#allocation2]]
  %v1664 = vstv %s1663
  %vm1665 = vcmask 261120
  %v1667 = vsel %vm1665, %v1662, 0
  %v1670 = vsel %vm1665, %v1598, 0
  %v1673 = vsel %vm1665, %v1599, 0
  %v1676 = vsel %vm1665, %v1600, 0
  %v1679 = vsel %vm1665, %v1601, 0
  %v1682 = vsel %vm1665, %v1602, 0
  %v1685 = vsel %vm1665, %v1603, 0
  %v1688 = vsel %vm1665, %v1604, 0
  %v1691 = vsel %vm1665, %v1605, 0
  %v1694 = vsel %vm1665, %v1606, 0
  %v1697 = vsel %vm1665, %v1607, 0
  %v1700 = vsel %vm1665, %v1608, 0
  %v1703 = vsel %vm1665, %v1609, 0
  %v1706 = vsel %vm1665, %v1610, 0
  %v1709 = vsel %vm1665, %v1611, 0
  %v1712 = vsel %vm1665, %v1612, 0
  %v1715 = vsel %vm1665, %v1613, 0
  %v1718 = vsel %vm1665, %v1614, 0
  %v1721 = vsel %vm1665, %v1615, 0
  %v1724 = vsel %vm1665, %v1616, 0
  %v1727 = vsel %vm1665, %v1617, 0
  %v1730 = vsel %vm1665, %v1618, 0
  %v1733 = vsel %vm1665, %v1619, 0
  %v1736 = vsel %vm1665, %v1620, 0
  %v1739 = vsel %vm1665, %v1621, 0
  %v1742 = vsel %vm1665, %v1622, 0
  %v1745 = vsel %vm1665, %v1623, 0
  %v1748 = vsel %vm1665, %v1624, 0
  %v1751 = vsel %vm1665, %v1625, 0
  %v1754 = vsel %vm1665, %v1626, 0
  %v1757 = vsel %vm1665, %v1627, 0
  %v1760 = vsel %vm1665, %v1628, 0
  %v1763 = vsel %vm1665, %v1629, 0
  %v1766 = vsel %vm1665, %v1630, 0
  %v1769 = vsel %vm1665, %v1631, 0
  %v1772 = vsel %vm1665, %v1632, 0
  %v1775 = vsel %vm1665, %v1633, 0
  %v1778 = vsel %vm1665, %v1634, 0
  %v1781 = vsel %vm1665, %v1635, 0
  %v1784 = vsel %vm1665, %v1636, 0
  %v1787 = vsel %vm1665, %v1637, 0
  %v1790 = vsel %vm1665, %v1638, 0
  %v1793 = vsel %vm1665, %v1639, 0
  %v1796 = vsel %vm1665, %v1640, 0
  %v1799 = vsel %vm1665, %v1641, 0
  %v1802 = vsel %vm1665, %v1642, 0
  %v1805 = vsel %vm1665, %v1643, 0
  %v1808 = vsel %vm1665, %v1644, 0
  %v1811 = vsel %vm1665, %v1645, 0
  %v1814 = vsel %vm1665, %v1646, 0
  %v1817 = vsel %vm1665, %v1647, 0
  %v1820 = vsel %vm1665, %v1648, 0
  %v1823 = vsel %vm1665, %v1649, 0
  %v1826 = vsel %vm1665, %v1650, 0
  %v1829 = vsel %vm1665, %v1651, 0
  %v1832 = vsel %vm1665, %v1652, 0
  %v1835 = vsel %vm1665, %v1653, 0
  %v1838 = vsel %vm1665, %v1654, 0
  %v1841 = vsel %vm1665, %v1655, 0
  %v1844 = vsel %vm1665, %v1656, 0
  %v1847 = vsel %vm1665, %v1657, 0
  %v1850 = vsel %vm1665, %v1658, 0
  %v1853 = vsel %vm1665, %v1659, 0
  %v1856 = vsel %vm1665, %v1660, 0
  %v1859 = vsel %vm1665, %v1661, 0
  %1861 = vmatprep.subr.mxu0 0.0
  %1862 = vmatpush1.xpose.msra.mxu0 %v1715
  %1863 = vmatprep.subr.mxu0 0.0
  %1864 = vmatpush1.xpose.msra.mxu0 %v1712
  %1865 = vmatprep.subr.mxu0 0.0
  %1866 = vmatpush1.xpose.msra.mxu0 %v1709
  %1867 = vmatprep.subr.mxu0 0.0
  %1868 = vmatpush1.xpose.msra.mxu0 %v1706
  %1869 = vmatprep.subr.mxu0 0.0
  %1870 = vmatpush1.xpose.msra.mxu0 %v1703
  %1871 = vmatprep.subr.mxu0 0.0
  %1872 = vmatpush1.xpose.msra.mxu0 %v1700
  %1873 = vmatprep.subr.mxu0 0.0
  %1874 = vmatpush1.xpose.msra.mxu0 %v1697
  %1875 = vmatprep.subr.mxu0 0.0
  %1876 = vmatpush1.xpose.msra.mxu0 %v1694
  %1877 = vmatprep.subr.mxu0 0.0
  %1878 = vmatpush1.xpose.msra.mxu0 %v1691
  %1879 = vmatprep.subr.mxu0 0.0
  %1880 = vmatpush1.xpose.msra.mxu0 %v1688
  %1881 = vmatprep.subr.mxu0 0.0
  %1882 = vmatpush1.xpose.msra.mxu0 %v1685
  %1883 = vmatprep.subr.mxu0 0.0
  %1884 = vmatpush1.xpose.msra.mxu0 %v1682
  %1885 = vmatprep.subr.mxu0 0.0
  %1886 = vmatpush1.xpose.msra.mxu0 %v1679
  %1887 = vmatprep.subr.mxu0 0.0
  %1888 = vmatpush1.xpose.msra.mxu0 %v1676
  %1889 = vmatprep.subr.mxu0 0.0
  %1890 = vmatpush1.xpose.msra.mxu0 %v1673
  %1891 = vmatprep.subr.mxu0 0.0
  %1892 = vmatpush1.xpose.msra.mxu0 %v1670
  %1893 = vmatprep.subr.mxu0 0.0
  %1894 = vmatpush2.xpose.msra.mxu0 %v1763
  %1895 = vmatprep.subr.mxu0 0.0
  %1896 = vmatpush2.xpose.msra.mxu0 %v1760
  %1897 = vmatprep.subr.mxu0 0.0
  %1898 = vmatpush2.xpose.msra.mxu0 %v1757
  %1899 = vmatprep.subr.mxu0 0.0
  %1900 = vmatpush2.xpose.msra.mxu0 %v1754
  %1901 = vmatprep.subr.mxu0 0.0
  %1902 = vmatpush2.xpose.msra.mxu0 %v1751
  %1903 = vmatprep.subr.mxu0 0.0
  %1904 = vmatpush2.xpose.msra.mxu0 %v1748
  %1905 = vmatprep.subr.mxu0 0.0
  %1906 = vmatpush2.xpose.msra.mxu0 %v1745
  %1907 = vmatprep.subr.mxu0 0.0
  %1908 = vmatpush2.xpose.msra.mxu0 %v1742
  %1909 = vmatprep.subr.mxu0 0.0
  %1910 = vmatpush2.xpose.msra.mxu0 %v1739
  %1911 = vmatprep.subr.mxu0 0.0
  %1912 = vmatpush2.xpose.msra.mxu0 %v1736
  %1913 = vmatprep.subr.mxu0 0.0
  %1914 = vmatpush2.xpose.msra.mxu0 %v1733
  %1915 = vmatprep.subr.mxu0 0.0
  %1916 = vmatpush2.xpose.msra.mxu0 %v1730
  %1917 = vmatprep.subr.mxu0 0.0
  %1918 = vmatpush2.xpose.msra.mxu0 %v1727
  %1919 = vmatprep.subr.mxu0 0.0
  %1920 = vmatpush2.xpose.msra.mxu0 %v1724
  %1921 = vmatprep.subr.mxu0 0.0
  %1922 = vmatpush2.xpose.msra.mxu0 %v1721
  %1923 = vmatprep.subr.mxu0 0.0
  %1924 = vmatpush2.xpose.msra.mxu0 %v1718
  %1925 = vmatprep.mubr.f32.mxu0 0.0
  %1926 = vmatmul.mubr.f32.gmra.mxu0 %v1667
  %v1927 = vpop.f32.mrf.mxu0
  %v1928 = vadd.f32 %v1664, %v1927
  %v1929 = vpop.f32.mrf.mxu0
  %v1930 = vadd.f32 %v1664, %v1929
  %1931 = vdwg.mxu0
  %1932 = vmatprep.subr.mxu0 0.0
  %1933 = vmatpush1.xpose.msra.mxu0 %v1811
  %1934 = vmatprep.subr.mxu0 0.0
  %1935 = vmatpush1.xpose.msra.mxu0 %v1808
  %1936 = vmatprep.subr.mxu0 0.0
  %1937 = vmatpush1.xpose.msra.mxu0 %v1805
  %1938 = vmatprep.subr.mxu0 0.0
  %1939 = vmatpush1.xpose.msra.mxu0 %v1802
  %1940 = vmatprep.subr.mxu0 0.0
  %1941 = vmatpush1.xpose.msra.mxu0 %v1799
  %1942 = vmatprep.subr.mxu0 0.0
  %1943 = vmatpush1.xpose.msra.mxu0 %v1796
  %1944 = vmatprep.subr.mxu0 0.0
  %1945 = vmatpush1.xpose.msra.mxu0 %v1793
  %1946 = vmatprep.subr.mxu0 0.0
  %1947 = vmatpush1.xpose.msra.mxu0 %v1790
  %1948 = vmatprep.subr.mxu0 0.0
  %1949 = vmatpush1.xpose.msra.mxu0 %v1787
  %1950 = vmatprep.subr.mxu0 0.0
  %1951 = vmatpush1.xpose.msra.mxu0 %v1784
  %1952 = vmatprep.subr.mxu0 0.0
  %1953 = vmatpush1.xpose.msra.mxu0 %v1781
  %1954 = vmatprep.subr.mxu0 0.0
  %1955 = vmatpush1.xpose.msra.mxu0 %v1778
  %1956 = vmatprep.subr.mxu0 0.0
  %1957 = vmatpush1.xpose.msra.mxu0 %v1775
  %1958 = vmatprep.subr.mxu0 0.0
  %1959 = vmatpush1.xpose.msra.mxu0 %v1772
  %1960 = vmatprep.subr.mxu0 0.0
  %1961 = vmatpush1.xpose.msra.mxu0 %v1769
  %1962 = vmatprep.subr.mxu0 0.0
  %1963 = vmatpush1.xpose.msra.mxu0 %v1766
  %1964 = vmatprep.subr.mxu0 0.0
  %1965 = vmatpush2.xpose.msra.mxu0 %v1859
  %1966 = vmatprep.subr.mxu0 0.0
  %1967 = vmatpush2.xpose.msra.mxu0 %v1856
  %1968 = vmatprep.subr.mxu0 0.0
  %1969 = vmatpush2.xpose.msra.mxu0 %v1853
  %1970 = vmatprep.subr.mxu0 0.0
  %1971 = vmatpush2.xpose.msra.mxu0 %v1850
  %1972 = vmatprep.subr.mxu0 0.0
  %1973 = vmatpush2.xpose.msra.mxu0 %v1847
  %1974 = vmatprep.subr.mxu0 0.0
  %1975 = vmatpush2.xpose.msra.mxu0 %v1844
  %1976 = vmatprep.subr.mxu0 0.0
  %1977 = vmatpush2.xpose.msra.mxu0 %v1841
  %1978 = vmatprep.subr.mxu0 0.0
  %1979 = vmatpush2.xpose.msra.mxu0 %v1838
  %1980 = vmatprep.subr.mxu0 0.0
  %1981 = vmatpush2.xpose.msra.mxu0 %v1835
  %1982 = vmatprep.subr.mxu0 0.0
  %1983 = vmatpush2.xpose.msra.mxu0 %v1832
  %1984 = vmatprep.subr.mxu0 0.0
  %1985 = vmatpush2.xpose.msra.mxu0 %v1829
  %1986 = vmatprep.subr.mxu0 0.0
  %1987 = vmatpush2.xpose.msra.mxu0 %v1826
  %1988 = vmatprep.subr.mxu0 0.0
  %1989 = vmatpush2.xpose.msra.mxu0 %v1823
  %1990 = vmatprep.subr.mxu0 0.0
  %1991 = vmatpush2.xpose.msra.mxu0 %v1820
  %1992 = vmatprep.subr.mxu0 0.0
  %1993 = vmatpush2.xpose.msra.mxu0 %v1817
  %1994 = vmatprep.subr.mxu0 0.0
  %1995 = vmatpush2.xpose.msra.mxu0 %v1814
  %1996 = vmatprep.mubr.f32.mxu0 0.0
  %1997 = vmatmul.mubr.f32.gmra.mxu0 %v1667
  %v1998 = vpop.f32.mrf.mxu0
  %v1999 = vadd.f32 %v1664, %v1998
  %v2000 = vpop.f32.mrf.mxu0
  %v2001 = vadd.f32 %v1664, %v2000
  %2002 = vdwg.mxu0
  %v2003 = vxor.u32 %v1928, 2147483648
  %v2004 = vxor.u32 %v1930, 2147483648
  %v2005 = vxor.u32 %v1999, 2147483648
  %v2006 = vxor.u32 %v2001, 2147483648
  %v2007 = vmul.f32 %v2003, 1.442695
  %v2008 = vpow.pop %v2007
  %v2009 = vmul.f32 %v2004, 1.442695
  %v2010 = vpow.pop %v2009
  %v2011 = vmul.f32 %v2005, 1.442695
  %v2012 = vpow.pop %v2011
  %v2013 = vmul.f32 %v2006, 1.442695
  %v2014 = vpow.pop %v2013
  %v2015 = vadd.f32 %v2008, 1.0
  %v2016 = vadd.f32 %v2010, 1.0
  %v2017 = vadd.f32 %v2012, 1.0
  %v2018 = vadd.f32 %v2014, 1.0
  %v2019 = vrcp.pop %v2015
  %v2020 = vmul.f32 1.0, %v2019
  %v2021 = vrcp.pop %v2016
  %v2022 = vmul.f32 1.0, %v2021
  %v2023 = vrcp.pop %v2017
  %v2024 = vmul.f32 1.0, %v2023
  %v2025 = vrcp.pop %v2018
  %v2026 = vmul.f32 1.0, %v2025
  %2027 = vst [vmem:[%s7] sm:$0xff] %v2020
  %2028 = vst [vmem:[%s7 + $0x8] sm:$0xff] %v2022
  %2029 = vst [vmem:[%s7 + $0x10] sm:$0xff] %v2024
  %2030 = vst [vmem:[%s7 + $0x18] sm:$0xff] %v2026
  // Predicated region
  $region30: #{classifier_forward.1} parent=0 // pred_check
    _
  $region31: #{classifier_forward.1} parent=0 // pred_check_branch
    %2032 = sbr.rel (0) target = $region33
  $region32: #{classifier_forward.1} parent=0 // pred_region
    _
  $region33: #{classifier_forward.1} parent=0 // pred_fallthru
    _
  // Predicated region
  $region34: #{classifier_forward.1} parent=0 // pred_check
    _
  $region35: #{classifier_forward.1} parent=0 // pred_check_branch
    %2034 = sbr.rel (0) target = $region37
  $region36: #{classifier_forward.1} parent=0 // pred_region
    _
  $region37: #{classifier_forward.1} parent=0 // pred_fallthru
    _

</llo_original>
